<compile_context>
chip_gen: v5e
topology: v5e:2x2
jax: 0.10.0
libtpu: 0.0.40
codegen_flags: <defaults>
</compile_context>

<pallas_src>
import math

import jax
import jax.numpy as jnp
from jax import lax
from jax.experimental import pallas as pl
from jax.experimental.pallas import tpu as pltpu

BN_EPS = 1e-5


# ------------------------------ small helpers ---------------------------------

def _round_up(x, m):
    return ((x + m - 1) // m) * m


def _tile_rows(m, max_tm=512):
    """Pick an M-tile (multiple of 8) and the padded row count."""
    tm = min(max_tm, _round_up(m, 8))
    mp = _round_up(m, tm)
    return tm, mp


# ----------------------------- Pallas kernels ----------------------------------

def _matmul_stats_kernel(p_ref, w_ref, y_ref, ps_ref):
    # p_ref: (1, TM, K) bf16, w_ref: (1, K, Cp) bf16
    # y_ref: (1, TM, Cp) f32, ps_ref: (1, 1, 2, Cp) f32  (per-tile sum / sum-of-squares)
    y = jnp.dot(p_ref[0], w_ref[0], preferred_element_type=jnp.float32)
    y_ref[...] = y[None]
    s1 = jnp.sum(y, axis=0, keepdims=True)
    s2 = jnp.sum(y * y, axis=0, keepdims=True)
    ps_ref[...] = jnp.concatenate([s1, s2], axis=0)[None, None]


def _bn_relu_kernel(y_ref, mu_ref, sc_ref, o_ref):
    # y_ref: (1, TM, Cp) f32, mu/sc: (1, Cp) f32, o_ref: (1, TM, Cp) bf16
    o_ref[...] = jnp.maximum((y_ref[...] - mu_ref[...]) * sc_ref[...], 0.0
                             ).astype(o_ref.dtype)


def _matmul_tanh_kernel(p_ref, w_ref, o_ref):
    y = jnp.dot(p_ref[0], w_ref[0], preferred_element_type=jnp.float32)
    o_ref[...] = jnp.tanh(y)[None]


# --------------------------- pallas_call wrappers -------------------------------

_PARALLEL2 = pltpu.CompilerParams(dimension_semantics=("parallel", "parallel"))


def _matmul_stats_call(p, w, tm):
    P, Mp, K = p.shape
    Cp = w.shape[2]
    nt = Mp // tm
    return pl.pallas_call(
        _matmul_stats_kernel,
        grid=(P, nt),
        out_shape=(jax.ShapeDtypeStruct((P, Mp, Cp), jnp.float32),
                   jax.ShapeDtypeStruct((P, nt, 2, Cp), jnp.float32)),
        in_specs=[pl.BlockSpec((1, tm, K), lambda ph, i: (ph, i, 0)),
                  pl.BlockSpec((1, K, Cp), lambda ph, i: (ph, 0, 0))],
        out_specs=(pl.BlockSpec((1, tm, Cp), lambda ph, i: (ph, i, 0)),
                   pl.BlockSpec((1, 1, 2, Cp), lambda ph, i: (ph, i, 0, 0))),
        compiler_params=_PARALLEL2,
    )(p, w)


def _bn_relu_call(y, mu, sc, tm):
    P, Mp, Cp = y.shape
    nt = Mp // tm
    return pl.pallas_call(
        _bn_relu_kernel,
        grid=(P, nt),
        out_shape=jax.ShapeDtypeStruct((P, Mp, Cp), jnp.bfloat16),
        in_specs=[pl.BlockSpec((1, tm, Cp), lambda ph, i: (ph, i, 0)),
                  pl.BlockSpec((1, Cp), lambda ph, i: (0, 0)),
                  pl.BlockSpec((1, Cp), lambda ph, i: (0, 0))],
        out_specs=pl.BlockSpec((1, tm, Cp), lambda ph, i: (ph, i, 0)),
        compiler_params=_PARALLEL2,
    )(y, mu, sc)


def _matmul_tanh_call(p, w, tm):
    P, Mp, K = p.shape
    Cp = w.shape[2]
    nt = Mp // tm
    return pl.pallas_call(
        _matmul_tanh_kernel,
        grid=(P, nt),
        out_shape=jax.ShapeDtypeStruct((P, Mp, Cp), jnp.float32),
        in_specs=[pl.BlockSpec((1, tm, K), lambda ph, i: (ph, i, 0)),
                  pl.BlockSpec((1, K, Cp), lambda ph, i: (ph, 0, 0))],
        out_specs=pl.BlockSpec((1, tm, Cp), lambda ph, i: (ph, i, 0)),
        compiler_params=_PARALLEL2,
    )(p, w)


# ------------------------------ layer blocks -----------------------------------

def _bn_matmul_block(patches, lp):
    """patches: [P, M, K] bf16 -> ReLU(BN(patches @ W)) : [P, M, c_cols] bf16."""
    P, M, _ = patches.shape
    w = lp["w_mat"]
    Cp = w.shape[2]
    c_cols, groups, co = lp["c_cols"], lp["groups"], lp["co"]
    tm, mp = _tile_rows(M)
    p = jnp.pad(patches, ((0, 0), (0, mp - M), (0, 0)))   # zero rows -> zero partial sums
    y, ps = _matmul_stats_call(p, w, tm)

    # Pool per-tile/per-phase partial sums into per-real-channel stats (tiny [Cp] math).
    s = ps.sum(axis=(0, 1))[:, :c_cols].reshape(2, groups, co).sum(axis=1)   # [2, Co]
    cnt = M * P * groups                                   # = N * Ho * Wo (PyTorch BN count)
    mean = s[0] / cnt
    var = jnp.maximum(s[1] / cnt - mean * mean, 0.0)       # E[y^2] - E[y]^2
    scale = lax.rsqrt(var + BN_EPS)
    mu_c = jnp.pad(jnp.tile(mean, groups), (0, Cp - c_cols)).reshape(1, Cp)
    sc_c = jnp.pad(jnp.tile(scale, groups), (0, Cp - c_cols)).reshape(1, Cp)

    out = _bn_relu_call(y, mu_c, sc_c, tm)                 # [P, Mp, Cp] bf16
    return out[:, :M, :c_cols]


def _tanh_matmul_block(patches, lp):
    P, M, _ = patches.shape
    tm, mp = _tile_rows(M)
    p = jnp.pad(patches, ((0, 0), (0, mp - M), (0, 0)))
    y = _matmul_tanh_call(p, lp["w_mat"], tm)              # [P, Mp, Cp] f32
    return y[:, :M, :lp["c_cols"]]


def _phase_patches(x_nhwc):
    """Sub-pixel patches for ConvTranspose2d(k=4, s=2, p=1): [N,H,W,Ci] -> [4, N*H*W, 4*Ci]."""
    N, H, W, Ci = x_nhwc.shape
    xp = jnp.pad(x_nhwc, ((0, 0), (1, 1), (1, 1), (0, 0)))
    phases = []
    for py in range(2):
        for px in range(2):
            taps = [xp[:, py + a:py + a + H, px + b:px + b + W, :]
                    for a in range(2) for b in range(2)]
            phases.append(jnp.stack(taps, axis=3).reshape(N * H * W, 4 * Ci))
    return jnp.stack(phases, axis=0)


# --------------------------- Generator definition -------------------------------

def _first_layer_wmat(w_t):
    """stride=1, pad=0, 1x1 input: pure matmul. Columns ordered (kh, kw, co)."""
    Ci, Co, k, _ = w_t.shape
    return jnp.transpose(w_t, (0, 2, 3, 1)).reshape(Ci, k * k * Co)[None]   # [1, Ci, 16*Co]


def _phase_wmat(w_t):
    """stride=2, pad=1, k=4: 2x2 sub-kernel per output phase. Rows ordered (a, b, ci)."""
    Ci, Co, k, _ = w_t.shape
    assert k == 4
    mats = []
    for py in range(2):
        for px in range(2):
            taps = [w_t[:, :, 3 - py - 2 * a, 3 - px - 2 * b]
                    for a in range(2) for b in range(2)]
            mats.append(jnp.stack(taps, axis=0).reshape(4 * Ci, Co))
    return jnp.stack(mats, axis=0)                                          # [4, 4*Ci, Co]


def make_generator_params(key, z_dim, hidden_dim, image_dim=3, resolution=16):
    """Mirrors Generator.__init__ layer-shape logic; precomputes MXU-ready weights."""
    hd_multiplier = 8
    n_layers = int(math.log2(resolution)) - 1
    params = []
    for i in range(n_layers):
        stride, pad, is_last = 2, 1, False
        coeff_in, coeff_out = 2 ** (i - 1), 2 ** i
        if i == 0:
            stride, pad = 1, 0
            coeff_in = hd_multiplier * hidden_dim / z_dim
        elif i == n_layers - 1:
            is_last = True
            coeff_out = hd_multiplier * hidden_dim / image_dim
        in_dim = int(hidden_dim * hd_multiplier / coeff_in)
        out_dim = int(hidden_dim * hd_multiplier / coeff_out)
        key, sub = jax.random.split(key)
        w = jax.random.normal(sub, (in_dim, out_dim, 4, 4), jnp.float32) * 0.05

        if i == 0:
            w_mat, groups = _first_layer_wmat(w), 16
        else:
            w_mat, groups = _phase_wmat(w), 1
        c_cols = w_mat.shape[2]
        cp = _round_up(c_cols, 128)   # lane-dense output columns
        w_mat = jnp.pad(w_mat, ((0, 0), (0, 0), (0, cp - c_cols))).astype(jnp.bfloat16)

        params.append(dict(w_raw=w, stride=stride, pad=pad, is_last=is_last,
                           w_mat=w_mat, c_cols=c_cols, groups=groups, co=out_dim))
    return params


def generator_forward(noise, params):
    """noise: [N, z_dim, 1, 1] NCHW -> image: [N, image_dim, R, R] NCHW."""
    N = noise.shape[0]
    assert noise.shape[2] == 1 and noise.shape[3] == 1, "layer 0 expects 1x1 spatial input"

    # Layer 0: 1x1 ConvTranspose(stride 1, pad 0) == dense matmul -> 4x4 NHWC.
    lp0 = params[0]
    p0 = noise.reshape(N, -1)[None].astype(jnp.bfloat16)          # [1, N, z]
    x = _bn_matmul_block(p0, lp0)[0].reshape(N, 4, 4, lp0["co"])  # NHWC bf16

    # Remaining layers: stride-2 upsampling via phase decomposition.
    for lp in params[1:]:
        Nb, H, W, _ = x.shape
        patches = _phase_patches(x).astype(jnp.bfloat16)          # [4, N*H*W, 4*Ci]
        if lp["is_last"]:
            out = _tanh_matmul_block(patches, lp)                 # [4, M, Co] f32
        else:
            out = _bn_matmul_block(patches, lp)                   # [4, M, Co] bf16
        Co = lp["co"]
        # pixel shuffle: phase (py,px) -> spatial (2h+py, 2w+px)
        x = out.reshape(2, 2, Nb, H, W, Co).transpose(2, 3, 0, 4, 1, 5) \
               .reshape(Nb, 2 * H, 2 * W, Co)
    return x.transpose(0, 3, 1, 2).astype(jnp.float32)            # NHWC -> NCHW


# ------------------------- Pure-JAX reference (check) ----------------------------
# The reference mirrors the kernel's deliberate precision choice (bf16 MXU operands,
# f32 accumulation), so the comparison only measures reduction-order / rounding-tie
# differences; deviation from a pure-f32 PyTorch run is within bf16 operand precision.

def _convt_ref(x, w, stride, pad):
    xb = x.astype(jnp.bfloat16)
    wb = w.astype(jnp.bfloat16)
    N, Ci, H, W = x.shape
    _, Co, k, _ = w.shape
    Hf = (H - 1) * stride + k
    full = jnp.zeros((N, Co, Hf, Hf), jnp.float32)
    for i in range(H):
        for j in range(W):
            contrib = jnp.einsum('nc,cokl->nokl', xb[:, :, i, j], wb,
                                 preferred_element_type=jnp.float32)
            full = full.at[:, :, i * stride:i * stride + k,
                           j * stride:j * stride + k].add(contrib)
    Ho = (H - 1) * stride - 2 * pad + k
    return full[:, :, pad:pad + Ho, pad:pad + Ho]


def generator_forward_ref(noise, params):
    # TODO(synk): BatchNorm running-stats update is a training-time side effect with no
    # functional output; only the train-mode normalization itself is reproduced.
    x = noise
    for lp in params:
        y = _convt_ref(x, lp["w_raw"], lp["stride"], lp["pad"])
        if lp["is_last"]:
            x = jnp.tanh(y)
        else:
            mu = jnp.mean(y, axis=(0, 2, 3), keepdims=True)
            var = jnp.mean((y - mu) ** 2, axis=(0, 2, 3), keepdims=True)
            x = jnp.maximum((y - mu) / jnp.sqrt(var + BN_EPS), 0.0)
    return x


# ----------------------------------- main ----------------------------------------

if __name__ == "__main__":
    z_dim, hidden_dim, image_dim, resolution = 8, 4, 3, 16
    batch = 2

    key = jax.random.PRNGKey(0)
    pkey, nkey = jax.random.split(key)
    params = make_generator_params(pkey, z_dim, hidden_dim, image_dim, resolution)
    noise = jax.random.normal(nkey, (batch, z_dim, 1, 1), jnp.float32)  # NCHW

    fwd = jax.jit(lambda z: generator_forward(z, params))
    out = jax.block_until_ready(fwd(noise))
    assert out.shape == (batch, image_dim, resolution, resolution), out.shape

    ref_fwd = jax.jit(lambda z: generator_forward_ref(z, params))
    ref = jax.block_until_ready(ref_fwd(noise))
    assert jnp.allclose(out, ref, atol=5e-3, rtol=5e-3), \
        float(jnp.max(jnp.abs(out - ref)))

    print("KERNEL_OK")
</pallas_src>

<mosaic_0001>
module attributes {stable_mosaic.version = 11 : i64} {
  func.func @_matmul_stats_kernel(%arg0: i32, %arg1: i32, %arg2: memref<1x8x8xbf16, #tpu.memory_space<vmem>>, %arg3: memref<1x8x512xbf16, #tpu.memory_space<vmem>>, %arg4: memref<1x8x512xf32, #tpu.memory_space<vmem>>, %arg5: memref<1x1x2x512xf32, #tpu.memory_space<vmem>>) attributes {dimension_semantics = [#tpu.dimension_semantics<parallel>, #tpu.dimension_semantics<parallel>], iteration_bounds = array<i64: 1, 1>, scalar_prefetch = 0 : i64, scratch_operands = 0 : i64, tpu.core_type = #tpu.core_type<tc>, window_params = [{transform_indices = @transform_0, window_bounds = array<i64: 1, 8, 8>}, {transform_indices = @transform_1, window_bounds = array<i64: 1, 8, 512>}, {transform_indices = @transform_2, window_bounds = array<i64: 1, 8, 512>}, {transform_indices = @transform_3, window_bounds = array<i64: 1, 1, 2, 512>}]} {
    %c0 = arith.constant 0 : index
    %c0_0 = arith.constant 0 : index
    %c0_1 = arith.constant 0 : index
    %0 = vector.load %arg2[%c0, %c0_0, %c0_1] : memref<1x8x8xbf16, #tpu.memory_space<vmem>>, vector<1x8x8xbf16>
    %1 = vector.shape_cast %0 : vector<1x8x8xbf16> to vector<8x8xbf16>
    %c0_2 = arith.constant 0 : index
    %c0_3 = arith.constant 0 : index
    %c0_4 = arith.constant 0 : index
    %2 = vector.load %arg3[%c0_2, %c0_3, %c0_4] : memref<1x8x512xbf16, #tpu.memory_space<vmem>>, vector<1x8x512xbf16>
    %3 = vector.shape_cast %2 : vector<1x8x512xbf16> to vector<8x512xbf16>
    %cst = arith.constant dense<0.000000e+00> : vector<8x512xf32>
    %4 = tpu.matmul %1, %3, %cst {dimension_numbers = #tpu.dot_dimension_numbers<[1], [0], [0], [1], [0, 0, 1, 1], [], []>} : vector<8x8xbf16>, vector<8x512xbf16>, vector<8x512xf32> -> vector<8x512xf32>
    %5 = vector.shape_cast %4 : vector<8x512xf32> to vector<1x8x512xf32>
    %c0_5 = arith.constant 0 : index
    %c0_6 = arith.constant 0 : index
    %c0_7 = arith.constant 0 : index
    %6 = vector.load %arg4[%c0_5, %c0_6, %c0_7] : memref<1x8x512xf32, #tpu.memory_space<vmem>>, vector<1x8x512xf32>
    tpu.vector_store %arg4[%c0_5, %c0_6, %c0_7], %5 {strides = array<i32>} : memref<1x8x512xf32, #tpu.memory_space<vmem>>, vector<1x8x512xf32>,
    %cst_8 = arith.constant dense<0.000000e+00> : vector<512xf32>
    %7 = vector.multi_reduction <add>, %4, %cst_8 [0] : vector<8x512xf32> to vector<512xf32>
    %8 = vector.shape_cast %7 : vector<512xf32> to vector<1x512xf32>
    %9 = arith.mulf %4, %4 : vector<8x512xf32>
    %cst_9 = arith.constant dense<0.000000e+00> : vector<512xf32>
    %10 = vector.multi_reduction <add>, %9, %cst_9 [0] : vector<8x512xf32> to vector<512xf32>
    %11 = vector.shape_cast %10 : vector<512xf32> to vector<1x512xf32>
    %12 = tpu.concatenate %8, %11 in 0 : vector<1x512xf32>, vector<1x512xf32> -> vector<2x512xf32>
    %13 = vector.shape_cast %12 : vector<2x512xf32> to vector<1x1x2x512xf32>
    %c0_10 = arith.constant 0 : index
    %c0_11 = arith.constant 0 : index
    %c0_12 = arith.constant 0 : index
    %c0_13 = arith.constant 0 : index
    %14 = vector.load %arg5[%c0_10, %c0_11, %c0_12, %c0_13] : memref<1x1x2x512xf32, #tpu.memory_space<vmem>>, vector<1x1x2x512xf32>
    tpu.vector_store %arg5[%c0_10, %c0_11, %c0_12, %c0_13], %13 {strides = array<i32>} : memref<1x1x2x512xf32, #tpu.memory_space<vmem>>, vector<1x1x2x512xf32>,
    return
  }
  func.func @transform_0(%arg0: i32, %arg1: i32) -> (i32, i32, i32) {
    %c0_i32 = arith.constant 0 : i32
    %c0_i32_0 = arith.constant 0 : i32
    return %arg0, %arg1, %c0_i32 : i32, i32, i32
  }
  func.func @transform_1(%arg0: i32, %arg1: i32) -> (i32, i32, i32) {
    %c0_i32 = arith.constant 0 : i32
    %c0_i32_0 = arith.constant 0 : i32
    %c0_i32_1 = arith.constant 0 : i32
    return %arg0, %c0_i32, %c0_i32_0 : i32, i32, i32
  }
  func.func @transform_2(%arg0: i32, %arg1: i32) -> (i32, i32, i32) {
    %c0_i32 = arith.constant 0 : i32
    %c0_i32_0 = arith.constant 0 : i32
    return %arg0, %arg1, %c0_i32 : i32, i32, i32
  }
  func.func @transform_3(%arg0: i32, %arg1: i32) -> (i32, i32, i32, i32) {
    %c0_i32 = arith.constant 0 : i32
    %c0_i32_0 = arith.constant 0 : i32
    %c0_i32_1 = arith.constant 0 : i32
    return %arg0, %arg1, %c0_i32, %c0_i32_0 : i32, i32, i32, i32
  }
}

module attributes {stable_mosaic.version = 11 : i64} {
  func.func @_bn_relu_kernel(%arg0: i32, %arg1: i32, %arg2: memref<1x8x512xf32, #tpu.memory_space<vmem>>, %arg3: memref<1x512xf32, #tpu.memory_space<vmem>>, %arg4: memref<1x512xf32, #tpu.memory_space<vmem>>, %arg5: memref<1x8x512xbf16, #tpu.memory_space<vmem>>) attributes {dimension_semantics = [#tpu.dimension_semantics<parallel>, #tpu.dimension_semantics<parallel>], iteration_bounds = array<i64: 1, 1>, scalar_prefetch = 0 : i64, scratch_operands = 0 : i64, tpu.core_type = #tpu.core_type<tc>, window_params = [{transform_indices = @transform_0, window_bounds = array<i64: 1, 8, 512>}, {pipeline_mode = #tpu.pipeline_mode<synchronous>, transform_indices = @transform_1, window_bounds = array<i64: 1, 512>}, {pipeline_mode = #tpu.pipeline_mode<synchronous>, transform_indices = @transform_2, window_bounds = array<i64: 1, 512>}, {transform_indices = @transform_3, window_bounds = array<i64: 1, 8, 512>}]} {
    %c0 = arith.constant 0 : index
    %c0_0 = arith.constant 0 : index
    %c0_1 = arith.constant 0 : index
    %0 = vector.load %arg2[%c0, %c0_0, %c0_1] : memref<1x8x512xf32, #tpu.memory_space<vmem>>, vector<1x8x512xf32>
    %c0_2 = arith.constant 0 : index
    %c0_3 = arith.constant 0 : index
    %1 = vector.load %arg3[%c0_2, %c0_3] : memref<1x512xf32, #tpu.memory_space<vmem>>, vector<1x512xf32>
    %2 = vector.shape_cast %1 : vector<1x512xf32> to vector<1x1x512xf32>
    %3 = vector.broadcast %2 : vector<1x1x512xf32> to vector<1x8x512xf32>
    %4 = arith.subf %0, %3 : vector<1x8x512xf32>
    %c0_4 = arith.constant 0 : index
    %c0_5 = arith.constant 0 : index
    %5 = vector.load %arg4[%c0_4, %c0_5] : memref<1x512xf32, #tpu.memory_space<vmem>>, vector<1x512xf32>
    %6 = vector.shape_cast %5 : vector<1x512xf32> to vector<1x1x512xf32>
    %7 = vector.broadcast %6 : vector<1x1x512xf32> to vector<1x8x512xf32>
    %8 = arith.mulf %4, %7 : vector<1x8x512xf32>
    %cst = arith.constant 0.000000e+00 : f32
    %9 = vector.broadcast %cst : f32 to vector<1x8x512xf32>
    %10 = arith.maximumf %8, %9 : vector<1x8x512xf32>
    %11 = arith.truncf %10 : vector<1x8x512xf32> to vector<1x8x512xbf16>
    %c0_6 = arith.constant 0 : index
    %c0_7 = arith.constant 0 : index
    %c0_8 = arith.constant 0 : index
    %12 = vector.load %arg5[%c0_6, %c0_7, %c0_8] : memref<1x8x512xbf16, #tpu.memory_space<vmem>>, vector<1x8x512xbf16>
    tpu.vector_store %arg5[%c0_6, %c0_7, %c0_8], %11 {strides = array<i32>} : memref<1x8x512xbf16, #tpu.memory_space<vmem>>, vector<1x8x512xbf16>,
    return
  }
  func.func @transform_0(%arg0: i32, %arg1: i32) -> (i32, i32, i32) {
    %c0_i32 = arith.constant 0 : i32
    %c0_i32_0 = arith.constant 0 : i32
    return %arg0, %arg1, %c0_i32 : i32, i32, i32
  }
  func.func @transform_1(%arg0: i32, %arg1: i32) -> (i32, i32) {
    %c0_i32 = arith.constant 0 : i32
    %c0_i32_0 = arith.constant 0 : i32
    %c0_i32_1 = arith.constant 0 : i32
    return %c0_i32, %c0_i32_0 : i32, i32
  }
  func.func @transform_2(%arg0: i32, %arg1: i32) -> (i32, i32) {
    %c0_i32 = arith.constant 0 : i32
    %c0_i32_0 = arith.constant 0 : i32
    %c0_i32_1 = arith.constant 0 : i32
    return %c0_i32, %c0_i32_0 : i32, i32
  }
  func.func @transform_3(%arg0: i32, %arg1: i32) -> (i32, i32, i32) {
    %c0_i32 = arith.constant 0 : i32
    %c0_i32_0 = arith.constant 0 : i32
    return %arg0, %arg1, %c0_i32 : i32, i32, i32
  }
}

module attributes {stable_mosaic.version = 11 : i64} {
  func.func @_matmul_stats_kernel(%arg0: i32, %arg1: i32, %arg2: memref<1x32x128xbf16, #tpu.memory_space<vmem>>, %arg3: memref<1x128x128xbf16, #tpu.memory_space<vmem>>, %arg4: memref<1x32x128xf32, #tpu.memory_space<vmem>>, %arg5: memref<1x1x2x128xf32, #tpu.memory_space<vmem>>) attributes {dimension_semantics = [#tpu.dimension_semantics<parallel>, #tpu.dimension_semantics<parallel>], iteration_bounds = array<i64: 4, 1>, scalar_prefetch = 0 : i64, scratch_operands = 0 : i64, tpu.core_type = #tpu.core_type<tc>, window_params = [{transform_indices = @transform_0, window_bounds = array<i64: 1, 32, 128>}, {transform_indices = @transform_1, window_bounds = array<i64: 1, 128, 128>}, {transform_indices = @transform_2, window_bounds = array<i64: 1, 32, 128>}, {transform_indices = @transform_3, window_bounds = array<i64: 1, 1, 2, 128>}]} {
    %c0 = arith.constant 0 : index
    %c0_0 = arith.constant 0 : index
    %c0_1 = arith.constant 0 : index
    %0 = vector.load %arg2[%c0, %c0_0, %c0_1] : memref<1x32x128xbf16, #tpu.memory_space<vmem>>, vector<1x32x128xbf16>
    %1 = vector.shape_cast %0 : vector<1x32x128xbf16> to vector<32x128xbf16>
    %c0_2 = arith.constant 0 : index
    %c0_3 = arith.constant 0 : index
    %c0_4 = arith.constant 0 : index
    %2 = vector.load %arg3[%c0_2, %c0_3, %c0_4] : memref<1x128x128xbf16, #tpu.memory_space<vmem>>, vector<1x128x128xbf16>
    %3 = vector.shape_cast %2 : vector<1x128x128xbf16> to vector<128x128xbf16>
    %cst = arith.constant dense<0.000000e+00> : vector<32x128xf32>
    %4 = tpu.matmul %1, %3, %cst {dimension_numbers = #tpu.dot_dimension_numbers<[1], [0], [0], [1], [0, 0, 1, 1], [], []>} : vector<32x128xbf16>, vector<128x128xbf16>, vector<32x128xf32> -> vector<32x128xf32>
    %5 = vector.shape_cast %4 : vector<32x128xf32> to vector<1x32x128xf32>
    %c0_5 = arith.constant 0 : index
    %c0_6 = arith.constant 0 : index
    %c0_7 = arith.constant 0 : index
    %6 = vector.load %arg4[%c0_5, %c0_6, %c0_7] : memref<1x32x128xf32, #tpu.memory_space<vmem>>, vector<1x32x128xf32>
    tpu.vector_store %arg4[%c0_5, %c0_6, %c0_7], %5 {strides = array<i32>} : memref<1x32x128xf32, #tpu.memory_space<vmem>>, vector<1x32x128xf32>,
    %cst_8 = arith.constant dense<0.000000e+00> : vector<128xf32>
    %7 = vector.multi_reduction <add>, %4, %cst_8 [0] : vector<32x128xf32> to vector<128xf32>
    %8 = vector.shape_cast %7 : vector<128xf32> to vector<1x128xf32>
    %9 = arith.mulf %4, %4 : vector<32x128xf32>
    %cst_9 = arith.constant dense<0.000000e+00> : vector<128xf32>
    %10 = vector.multi_reduction <add>, %9, %cst_9 [0] : vector<32x128xf32> to vector<128xf32>
    %11 = vector.shape_cast %10 : vector<128xf32> to vector<1x128xf32>
    %12 = tpu.concatenate %8, %11 in 0 : vector<1x128xf32>, vector<1x128xf32> -> vector<2x128xf32>
    %13 = vector.shape_cast %12 : vector<2x128xf32> to vector<1x1x2x128xf32>
    %c0_10 = arith.constant 0 : index
    %c0_11 = arith.constant 0 : index
    %c0_12 = arith.constant 0 : index
    %c0_13 = arith.constant 0 : index
    %14 = vector.load %arg5[%c0_10, %c0_11, %c0_12, %c0_13] : memref<1x1x2x128xf32, #tpu.memory_space<vmem>>, vector<1x1x2x128xf32>
    tpu.vector_store %arg5[%c0_10, %c0_11, %c0_12, %c0_13], %13 {strides = array<i32>} : memref<1x1x2x128xf32, #tpu.memory_space<vmem>>, vector<1x1x2x128xf32>,
    return
  }
  func.func @transform_0(%arg0: i32, %arg1: i32) -> (i32, i32, i32) {
    %c0_i32 = arith.constant 0 : i32
    %c0_i32_0 = arith.constant 0 : i32
    return %arg0, %arg1, %c0_i32 : i32, i32, i32
  }
  func.func @transform_1(%arg0: i32, %arg1: i32) -> (i32, i32, i32) {
    %c0_i32 = arith.constant 0 : i32
    %c0_i32_0 = arith.constant 0 : i32
    %c0_i32_1 = arith.constant 0 : i32
    return %arg0, %c0_i32, %c0_i32_0 : i32, i32, i32
  }
  func.func @transform_2(%arg0: i32, %arg1: i32) -> (i32, i32, i32) {
    %c0_i32 = arith.constant 0 : i32
    %c0_i32_0 = arith.constant 0 : i32
    return %arg0, %arg1, %c0_i32 : i32, i32, i32
  }
  func.func @transform_3(%arg0: i32, %arg1: i32) -> (i32, i32, i32, i32) {
    %c0_i32 = arith.constant 0 : i32
    %c0_i32_0 = arith.constant 0 : i32
    %c0_i32_1 = arith.constant 0 : i32
    return %arg0, %arg1, %c0_i32, %c0_i32_0 : i32, i32, i32, i32
  }
}

module attributes {stable_mosaic.version = 11 : i64} {
  func.func @_bn_relu_kernel(%arg0: i32, %arg1: i32, %arg2: memref<1x32x128xf32, #tpu.memory_space<vmem>>, %arg3: memref<1x128xf32, #tpu.memory_space<vmem>>, %arg4: memref<1x128xf32, #tpu.memory_space<vmem>>, %arg5: memref<1x32x128xbf16, #tpu.memory_space<vmem>>) attributes {dimension_semantics = [#tpu.dimension_semantics<parallel>, #tpu.dimension_semantics<parallel>], iteration_bounds = array<i64: 4, 1>, scalar_prefetch = 0 : i64, scratch_operands = 0 : i64, tpu.core_type = #tpu.core_type<tc>, window_params = [{transform_indices = @transform_0, window_bounds = array<i64: 1, 32, 128>}, {pipeline_mode = #tpu.pipeline_mode<synchronous>, transform_indices = @transform_1, window_bounds = array<i64: 1, 128>}, {pipeline_mode = #tpu.pipeline_mode<synchronous>, transform_indices = @transform_2, window_bounds = array<i64: 1, 128>}, {transform_indices = @transform_3, window_bounds = array<i64: 1, 32, 128>}]} {
    %c0 = arith.constant 0 : index
    %c0_0 = arith.constant 0 : index
    %c0_1 = arith.constant 0 : index
    %0 = vector.load %arg2[%c0, %c0_0, %c0_1] : memref<1x32x128xf32, #tpu.memory_space<vmem>>, vector<1x32x128xf32>
    %c0_2 = arith.constant 0 : index
    %c0_3 = arith.constant 0 : index
    %1 = vector.load %arg3[%c0_2, %c0_3] : memref<1x128xf32, #tpu.memory_space<vmem>>, vector<1x128xf32>
    %2 = vector.shape_cast %1 : vector<1x128xf32> to vector<1x1x128xf32>
    %3 = vector.broadcast %2 : vector<1x1x128xf32> to vector<1x32x128xf32>
    %4 = arith.subf %0, %3 : vector<1x32x128xf32>
    %c0_4 = arith.constant 0 : index
    %c0_5 = arith.constant 0 : index
    %5 = vector.load %arg4[%c0_4, %c0_5] : memref<1x128xf32, #tpu.memory_space<vmem>>, vector<1x128xf32>
    %6 = vector.shape_cast %5 : vector<1x128xf32> to vector<1x1x128xf32>
    %7 = vector.broadcast %6 : vector<1x1x128xf32> to vector<1x32x128xf32>
    %8 = arith.mulf %4, %7 : vector<1x32x128xf32>
    %cst = arith.constant 0.000000e+00 : f32
    %9 = vector.broadcast %cst : f32 to vector<1x32x128xf32>
    %10 = arith.maximumf %8, %9 : vector<1x32x128xf32>
    %11 = arith.truncf %10 : vector<1x32x128xf32> to vector<1x32x128xbf16>
    %c0_6 = arith.constant 0 : index
    %c0_7 = arith.constant 0 : index
    %c0_8 = arith.constant 0 : index
    %12 = vector.load %arg5[%c0_6, %c0_7, %c0_8] : memref<1x32x128xbf16, #tpu.memory_space<vmem>>, vector<1x32x128xbf16>
    tpu.vector_store %arg5[%c0_6, %c0_7, %c0_8], %11 {strides = array<i32>} : memref<1x32x128xbf16, #tpu.memory_space<vmem>>, vector<1x32x128xbf16>,
    return
  }
  func.func @transform_0(%arg0: i32, %arg1: i32) -> (i32, i32, i32) {
    %c0_i32 = arith.constant 0 : i32
    %c0_i32_0 = arith.constant 0 : i32
    return %arg0, %arg1, %c0_i32 : i32, i32, i32
  }
  func.func @transform_1(%arg0: i32, %arg1: i32) -> (i32, i32) {
    %c0_i32 = arith.constant 0 : i32
    %c0_i32_0 = arith.constant 0 : i32
    %c0_i32_1 = arith.constant 0 : i32
    return %c0_i32, %c0_i32_0 : i32, i32
  }
  func.func @transform_2(%arg0: i32, %arg1: i32) -> (i32, i32) {
    %c0_i32 = arith.constant 0 : i32
    %c0_i32_0 = arith.constant 0 : i32
    %c0_i32_1 = arith.constant 0 : i32
    return %c0_i32, %c0_i32_0 : i32, i32
  }
  func.func @transform_3(%arg0: i32, %arg1: i32) -> (i32, i32, i32) {
    %c0_i32 = arith.constant 0 : i32
    %c0_i32_0 = arith.constant 0 : i32
    return %arg0, %arg1, %c0_i32 : i32, i32, i32
  }
}

module attributes {stable_mosaic.version = 11 : i64} {
  func.func @_matmul_tanh_kernel(%arg0: i32, %arg1: i32, %arg2: memref<1x128x64xbf16, #tpu.memory_space<vmem>>, %arg3: memref<1x64x128xbf16, #tpu.memory_space<vmem>>, %arg4: memref<1x128x128xf32, #tpu.memory_space<vmem>>) attributes {dimension_semantics = [#tpu.dimension_semantics<parallel>, #tpu.dimension_semantics<parallel>], iteration_bounds = array<i64: 4, 1>, scalar_prefetch = 0 : i64, scratch_operands = 0 : i64, tpu.core_type = #tpu.core_type<tc>, window_params = [{transform_indices = @transform_0, window_bounds = array<i64: 1, 128, 64>}, {transform_indices = @transform_1, window_bounds = array<i64: 1, 64, 128>}, {transform_indices = @transform_2, window_bounds = array<i64: 1, 128, 128>}]} {
    %c0 = arith.constant 0 : index
    %c0_0 = arith.constant 0 : index
    %c0_1 = arith.constant 0 : index
    %0 = vector.load %arg2[%c0, %c0_0, %c0_1] : memref<1x128x64xbf16, #tpu.memory_space<vmem>>, vector<1x128x64xbf16>
    %1 = vector.shape_cast %0 : vector<1x128x64xbf16> to vector<128x64xbf16>
    %c0_2 = arith.constant 0 : index
    %c0_3 = arith.constant 0 : index
    %c0_4 = arith.constant 0 : index
    %2 = vector.load %arg3[%c0_2, %c0_3, %c0_4] : memref<1x64x128xbf16, #tpu.memory_space<vmem>>, vector<1x64x128xbf16>
    %3 = vector.shape_cast %2 : vector<1x64x128xbf16> to vector<64x128xbf16>
    %cst = arith.constant dense<0.000000e+00> : vector<128x128xf32>
    %4 = tpu.matmul %1, %3, %cst {dimension_numbers = #tpu.dot_dimension_numbers<[1], [0], [0], [1], [0, 0, 1, 1], [], []>} : vector<128x64xbf16>, vector<64x128xbf16>, vector<128x128xf32> -> vector<128x128xf32>
    %5 = math.tanh %4 : vector<128x128xf32>
    %6 = vector.shape_cast %5 : vector<128x128xf32> to vector<1x128x128xf32>
    %c0_5 = arith.constant 0 : index
    %c0_6 = arith.constant 0 : index
    %c0_7 = arith.constant 0 : index
    %7 = vector.load %arg4[%c0_5, %c0_6, %c0_7] : memref<1x128x128xf32, #tpu.memory_space<vmem>>, vector<1x128x128xf32>
    tpu.vector_store %arg4[%c0_5, %c0_6, %c0_7], %6 {strides = array<i32>} : memref<1x128x128xf32, #tpu.memory_space<vmem>>, vector<1x128x128xf32>,
    return
  }
  func.func @transform_0(%arg0: i32, %arg1: i32) -> (i32, i32, i32) {
    %c0_i32 = arith.constant 0 : i32
    %c0_i32_0 = arith.constant 0 : i32
    return %arg0, %arg1, %c0_i32 : i32, i32, i32
  }
  func.func @transform_1(%arg0: i32, %arg1: i32) -> (i32, i32, i32) {
    %c0_i32 = arith.constant 0 : i32
    %c0_i32_0 = arith.constant 0 : i32
    %c0_i32_1 = arith.constant 0 : i32
    return %arg0, %c0_i32, %c0_i32_0 : i32, i32, i32
  }
  func.func @transform_2(%arg0: i32, %arg1: i32) -> (i32, i32, i32) {
    %c0_i32 = arith.constant 0 : i32
    %c0_i32_0 = arith.constant 0 : i32
    return %arg0, %arg1, %c0_i32 : i32, i32, i32
  }
}

</mosaic_0001>

<llo_original>
// kernel: tile.18
$region0: #{tile.18}
  #allocation0 [shape = 's32[1]{0}', space=sflag, size = 0x4, scoped, tag = 'scoped memory for tile.18']
  %s0 = inlined_call_operand.vmem [shape: f32[32], index: 0, kind: input, shape index: {}]
  %s1 = inlined_call_operand.vmem [shape: f32[16,32], index: 1, kind: output, shape index: {}]
  // Predicated region
  $region2: #{tile.18} parent=0 // pred_check
    _
  $region3: #{tile.18} parent=0 // pred_check_branch
    %3 = sbr.rel (0) target = $region5
  $region4: #{tile.18} parent=0 // pred_region
    _
  $region5: #{tile.18} parent=0 // pred_fallthru
    _
  %v4 = vld [vmem:[%s0] ss:$0 sm:$0xff]
  %5 = vst [vmem:[%s1] sm:$0xff] %v4
  %s6 = scalar_lea.vmem %s1, 8
  %7 = vst [vmem:[%s6] sm:$0xff] %v4

// kernel: squeeze.7
$region0: #{squeeze.7}
  %s0 = inlined_call_operand.vmem [shape: bf16[1,2,512], index: 0, kind: input, shape index: {}]
  %s1 = inlined_call_operand.vmem [shape: bf16[2,4,4,32], index: 1, kind: output, shape index: {}]
  $region1: #{squeeze.7} parent=0
    #allocation0 [shape = 'u8[32768]{0}', space=vmem, size = 0x8000, scoped, tag = 'scoped mem for output reshape']
    #allocation1 [shape = 'u8[16384]{0}', space=vmem, size = 0x4000, scoped, tag = 'scoped mem for input reshape']
    %s3 = ssub.s32 4, 1
    %s4 = scalar_lea.vmem %s0, 3
    %s5 = sshrl.u32 %s3, 1
    %s6 = sor.u32 %s3, %s5
    %s7 = sand.u32 %s6, 85
    %s8 = sshrl.u32 %s7, 1
    %s9 = sor.u32 %s7, %s8
    %s10 = sand.u32 51, %s9
    %s11 = sshrl.u32 %s10, 2
    %s12 = sor.u32 %s10, %s11
    %s13 = sand.u32 15, %s12
    %v14 = vld [vmem:[%s4] sm:%s13]
    %v15 = vunpack.c.l.bf16 %v14
    %v16 = vunpack.c.h.bf16 %v14
    %s17 = scalar_lea.vmem [#allocation1], 24
    %18 = vst [vmem:[%s17] sm:%s3] %v15
    %s19 = scalar_lea.vmem %s0, 2
    %s20 = sshrl.u32 %s3, 1
    %s21 = sor.u32 %s3, %s20
    %s22 = sand.u32 %s21, 85
    %s23 = sshrl.u32 %s22, 1
    %s24 = sor.u32 %s22, %s23
    %s25 = sand.u32 51, %s24
    %s26 = sshrl.u32 %s25, 2
    %s27 = sor.u32 %s25, %s26
    %s28 = sand.u32 15, %s27
    %v29 = vld [vmem:[%s19] sm:%s28]
    %v30 = vunpack.c.l.bf16 %v29
    %v31 = vunpack.c.h.bf16 %v29
    %s32 = scalar_lea.vmem [#allocation1], 16
    %33 = vst [vmem:[%s32] sm:%s3] %v30
    %s34 = scalar_lea.vmem %s0, 1
    %s35 = sshrl.u32 %s3, 1
    %s36 = sor.u32 %s3, %s35
    %s37 = sand.u32 %s36, 85
    %s38 = sshrl.u32 %s37, 1
    %s39 = sor.u32 %s37, %s38
    %s40 = sand.u32 51, %s39
    %s41 = sshrl.u32 %s40, 2
    %s42 = sor.u32 %s40, %s41
    %s43 = sand.u32 15, %s42
    %v44 = vld [vmem:[%s34] sm:%s43]
    %v45 = vunpack.c.l.bf16 %v44
    %v46 = vunpack.c.h.bf16 %v44
    %s47 = scalar_lea.vmem [#allocation1], 8
    %48 = vst [vmem:[%s47] sm:%s3] %v45
    %s49 = sshrl.u32 %s3, 1
    %s50 = sor.u32 %s3, %s49
    %s51 = sand.u32 %s50, 85
    %s52 = sshrl.u32 %s51, 1
    %s53 = sor.u32 %s51, %s52
    %s54 = sand.u32 51, %s53
    %s55 = sshrl.u32 %s54, 2
    %s56 = sor.u32 %s54, %s55
    %s57 = sand.u32 15, %s56
    %v58 = vld [vmem:[%s0] sm:%s57]
    %v59 = vunpack.c.l.bf16 %v58
    %v60 = vunpack.c.h.bf16 %v58
    %61 = vst [vmem:[#allocation1] sm:%s3] %v59
    %v62 = vld [vmem:[#allocation1] sm:$0x3]
    %vm63 = vcmask 261120
    %64 = vst.msk [vmem:[#allocation0] sm:$0x1] %vm63, %v62
    %s65 = scalar_lea.vmem [#allocation0], 31
    %66 = vst.msk [vmem:[%s65] sm:$0x2] %vm63, %v62
    %s67 = scalar_lea.vmem [#allocation1], 8
    %v68 = vld [vmem:[%s67] sm:$0x3]
    %vm69 = vcmask 261120
    %s70 = scalar_lea.vmem [#allocation0], 8
    %71 = vst.msk [vmem:[%s70] sm:$0x1] %vm69, %v68
    %s72 = scalar_lea.vmem [#allocation0], 39
    %73 = vst.msk [vmem:[%s72] sm:$0x2] %vm69, %v68
    %s74 = scalar_lea.vmem [#allocation1], 16
    %v75 = vld [vmem:[%s74] sm:$0x3]
    %vm76 = vcmask 261120
    %s77 = scalar_lea.vmem [#allocation0], 16
    %78 = vst.msk [vmem:[%s77] sm:$0x1] %vm76, %v75
    %s79 = scalar_lea.vmem [#allocation0], 47
    %80 = vst.msk [vmem:[%s79] sm:$0x2] %vm76, %v75
    %s81 = scalar_lea.vmem [#allocation1], 24
    %v82 = vld [vmem:[%s81] sm:$0x3]
    %vm83 = vcmask 261120
    %s84 = scalar_lea.vmem [#allocation0], 24
    %85 = vst.msk [vmem:[%s84] sm:$0x1] %vm83, %v82
    %s86 = scalar_lea.vmem [#allocation0], 55
    %87 = vst.msk [vmem:[%s86] sm:$0x2] %vm83, %v82
    %v88 = vld [vmem:[#allocation1] ss:$8 sm:$0xf]
    %s89 = scalar_lea.vmem [#allocation1], 4294967265
    %v90 = vld [vmem:[%s89] ss:$8 sm:$0xf0]
    %vm91 = vcmask 1047556
    %v92 = vsel %vm91, %v90, %v88
    %93 = vrot.lane.b32.xlu0 %v92, 96
    %v94 = vpop.permute.xlu0 %93
    %vm95 = vcmask 261120
    %s96 = scalar_lea.vmem [#allocation0], 1
    %97 = vst.msk [vmem:[%s96] ss:$8 sm:$0xf] %vm95, %v94
    %s98 = scalar_lea.vmem [#allocation0], 1
    %99 = vst.msk [vmem:[%s98] ss:$8 sm:$0xf0] %vm95, %v94
    %v100 = vld [vmem:[#allocation1] ss:$8 sm:$0xf]
    %s101 = scalar_lea.vmem [#allocation1], 4294967265
    %v102 = vld [vmem:[%s101] ss:$8 sm:$0xf0]
    %vm103 = vcmask 1047556
    %v104 = vsel %vm103, %v102, %v100
    %105 = vrot.lane.b32.xlu0 %v104, 64
    %v106 = vpop.permute.xlu0 %105
    %vm107 = vcmask 261120
    %s108 = scalar_lea.vmem [#allocation0], 2
    %109 = vst.msk [vmem:[%s108] ss:$8 sm:$0xf] %vm107, %v106
    %s110 = scalar_lea.vmem [#allocation0], 2
    %111 = vst.msk [vmem:[%s110] ss:$8 sm:$0xf0] %vm107, %v106
    %v112 = vld [vmem:[#allocation1] ss:$8 sm:$0xf]
    %s113 = scalar_lea.vmem [#allocation1], 4294967265
    %v114 = vld [vmem:[%s113] ss:$8 sm:$0xf0]
    %vm115 = vcmask 1047556
    %v116 = vsel %vm115, %v114, %v112
    %117 = vrot.lane.b32.xlu0 %v116, 32
    %v118 = vpop.permute.xlu0 %117
    %vm119 = vcmask 261120
    %s120 = scalar_lea.vmem [#allocation0], 3
    %121 = vst.msk [vmem:[%s120] ss:$8 sm:$0xf] %vm119, %v118
    %s122 = scalar_lea.vmem [#allocation0], 3
    %123 = vst.msk [vmem:[%s122] ss:$8 sm:$0xf0] %vm119, %v118
    %s125 = ssub.s32 16, 1
    %v126 = vld [vmem:[#allocation0] sm:%s125]
    %v127 = vpack.c.bf16 0.0, %v126
    %s129 = ssub.s32 4, 1
    %130 = vst [vmem:[%s1] sm:%s129] %v127
    %s131 = scalar_lea.vmem [#allocation0], 8
    %v132 = vld [vmem:[%s131] sm:%s125]
    %v133 = vpack.c.bf16 0.0, %v132
    %s135 = ssub.s32 4, 1
    %s136 = scalar_lea.vmem %s1, 2
    %137 = vst [vmem:[%s136] sm:%s135] %v133
    %s138 = scalar_lea.vmem [#allocation0], 16
    %v139 = vld [vmem:[%s138] sm:%s125]
    %v140 = vpack.c.bf16 0.0, %v139
    %s142 = ssub.s32 4, 1
    %s143 = scalar_lea.vmem %s1, 4
    %144 = vst [vmem:[%s143] sm:%s142] %v140
    %s145 = scalar_lea.vmem [#allocation0], 24
    %v146 = vld [vmem:[%s145] sm:%s125]
    %v147 = vpack.c.bf16 0.0, %v146
    %s149 = ssub.s32 4, 1
    %s150 = scalar_lea.vmem %s1, 6
    %151 = vst [vmem:[%s150] sm:%s149] %v147
    %s152 = scalar_lea.vmem [#allocation0], 32
    %v153 = vld [vmem:[%s152] sm:%s125]
    %v154 = vpack.c.bf16 0.0, %v153
    %s156 = ssub.s32 4, 1
    %s157 = scalar_lea.vmem %s1, 8
    %158 = vst [vmem:[%s157] sm:%s156] %v154
    %s159 = scalar_lea.vmem [#allocation0], 40
    %v160 = vld [vmem:[%s159] sm:%s125]
    %v161 = vpack.c.bf16 0.0, %v160
    %s163 = ssub.s32 4, 1
    %s164 = scalar_lea.vmem %s1, 10
    %165 = vst [vmem:[%s164] sm:%s163] %v161
    %s166 = scalar_lea.vmem [#allocation0], 48
    %v167 = vld [vmem:[%s166] sm:%s125]
    %v168 = vpack.c.bf16 0.0, %v167
    %s170 = ssub.s32 4, 1
    %s171 = scalar_lea.vmem %s1, 12
    %172 = vst [vmem:[%s171] sm:%s170] %v168
    %s173 = scalar_lea.vmem [#allocation0], 56
    %v174 = vld [vmem:[%s173] sm:%s125]
    %v175 = vpack.c.bf16 0.0, %v174
    %s177 = ssub.s32 4, 1
    %s178 = scalar_lea.vmem %s1, 14
    %179 = vst [vmem:[%s178] sm:%s177] %v175

// kernel: _lambda_.5
$region0: #{_lambda_.5}
  #allocation0 [shape = 'u32[]', space=smem, size = 0x4, offset = 0x4, fixed_abs, tag = 'smem constant byte address 0x4 - core index']
  #allocation1 [shape = 'u32[72,128]{1,0:T(1,128)}', space=vmem, size = 0x9000, scoped, tag = 'internal scratch']
  %s0 = inlined_call_operand.vmem [shape: bf16[1,8,8], index: 0, kind: input, shape index: {}]
  %s1 = inlined_call_operand.vmem [shape: bf16[1,8,512], index: 1, kind: input, shape index: {}]
  %s2 = inlined_call_operand.vmem [shape: f32[1,8,512], index: 2, kind: output, shape index: {0}]
  %s3 = inlined_call_operand.vmem [shape: f32[1,1,2,512], index: 3, kind: output, shape index: {1}]
  %4 = xla_tuple %s2, %s3
  %s5 = sld [smem:[#allocation0]]
  $region26: #{_lambda_.5} parent=0
    _
  %s7 = ssub.s32 1, %s5
  %s8 = scalar_select 0, %s7, %s5
  // Predicated region
  $region2: #{_lambda_.5} parent=0 // pred_check
    _
  $region3: #{_lambda_.5} parent=0 // pred_check_branch
    %10 = sbr.rel (0) target = $region5
  $region4: #{_lambda_.5} parent=0 // pred_region
    _
  $region5: #{_lambda_.5} parent=0 // pred_fallthru
    _
  // Predicated region
  $region6: #{_lambda_.5} parent=0 // pred_check
    _
  $region7: #{_lambda_.5} parent=0 // pred_check_branch
    %12 = sbr.rel (0) target = $region9
  $region8: #{_lambda_.5} parent=0 // pred_region
    _
  $region9: #{_lambda_.5} parent=0 // pred_fallthru
    _
  %v14 = vld [vmem:[%s0] sm:$0xf]
  %v15 = vld [vmem:[%s1] sm:$0xff]
  %v16 = vld [vmem:[%s1 + $0x8] sm:$0xff]
  %v19 = vunpack.c.l.b16 %v15
  %v20 = vunpack.c.h.b16 %v15
  %v21 = vunpack.c.l.b16 %v16
  %v22 = vunpack.c.h.b16 %v16
  %v23 = vpack.c.b16 %v19, %v19
  %v24 = vpack.c.b16 %v20, %v20
  %v25 = vpack.c.b16 %v21, %v21
  %v26 = vpack.c.b16 %v22, %v22
  %vm27 = vcmask 64512
  %v29 = vsel %vm27, %v14, 0
  %vm31 = vcmask 1043456
  %v33 = vsel %vm31, %v23, 0
  %v36 = vsel %vm31, %v24, 0
  %v39 = vsel %vm31, %v25, 0
  %v42 = vsel %vm31, %v26, 0
  %44 = vmatpush.bf16.msra.mxu0 0
  %45 = vmatpush.bf16.msra.mxu0 0
  %46 = vmatpush.bf16.msra.mxu0 0
  %47 = vmatpush.bf16.msra.mxu0 0
  %48 = vmatpush.bf16.msra.mxu0 0
  %49 = vmatpush.bf16.msra.mxu0 0
  %50 = vmatpush.bf16.msra.mxu0 0
  %51 = vmatpush.bf16.msra.mxu0 %v33
  %52 = vmatmul.bf16.gmra.mxu0 %v29
  %v53 = vpop.f32.mrf.mxu0
  %v54 = vadd.f32 0.0, %v53
  %v55 = vpop.f32.mrf.mxu0
  %56 = vdwg.mxu0
  %57 = vmatpush.bf16.msra.mxu0 0
  %58 = vmatpush.bf16.msra.mxu0 0
  %59 = vmatpush.bf16.msra.mxu0 0
  %60 = vmatpush.bf16.msra.mxu0 0
  %61 = vmatpush.bf16.msra.mxu0 0
  %62 = vmatpush.bf16.msra.mxu0 0
  %63 = vmatpush.bf16.msra.mxu0 0
  %64 = vmatpush.bf16.msra.mxu0 %v36
  %65 = vmatmul.bf16.gmra.mxu0 %v29
  %v66 = vpop.f32.mrf.mxu0
  %v67 = vadd.f32 0.0, %v66
  %v68 = vpop.f32.mrf.mxu0
  %69 = vdwg.mxu0
  %70 = vmatpush.bf16.msra.mxu0 0
  %71 = vmatpush.bf16.msra.mxu0 0
  %72 = vmatpush.bf16.msra.mxu0 0
  %73 = vmatpush.bf16.msra.mxu0 0
  %74 = vmatpush.bf16.msra.mxu0 0
  %75 = vmatpush.bf16.msra.mxu0 0
  %76 = vmatpush.bf16.msra.mxu0 0
  %77 = vmatpush.bf16.msra.mxu0 %v39
  %78 = vmatmul.bf16.gmra.mxu0 %v29
  %v79 = vpop.f32.mrf.mxu0
  %v80 = vadd.f32 0.0, %v79
  %v81 = vpop.f32.mrf.mxu0
  %82 = vdwg.mxu0
  %83 = vmatpush.bf16.msra.mxu0 0
  %84 = vmatpush.bf16.msra.mxu0 0
  %85 = vmatpush.bf16.msra.mxu0 0
  %86 = vmatpush.bf16.msra.mxu0 0
  %87 = vmatpush.bf16.msra.mxu0 0
  %88 = vmatpush.bf16.msra.mxu0 0
  %89 = vmatpush.bf16.msra.mxu0 0
  %90 = vmatpush.bf16.msra.mxu0 %v42
  %91 = vmatmul.bf16.gmra.mxu0 %v29
  %v92 = vpop.f32.mrf.mxu0
  %v93 = vadd.f32 0.0, %v92
  %v94 = vpop.f32.mrf.mxu0
  %95 = vdwg.mxu0
  %96 = vst [vmem:[%s2] sm:$0xff] %v54
  %97 = vst [vmem:[%s2 + $0x8] sm:$0xff] %v67
  %98 = vst [vmem:[%s2 + $0x10] sm:$0xff] %v80
  %99 = vst [vmem:[%s2 + $0x18] sm:$0xff] %v93
  %v100 = vrot.slane %v54, 4
  %v101 = vadd.f32 %v54, %v100
  %v102 = vrot.slane %v101, 2
  %v103 = vadd.f32 %v101, %v102
  %v104 = vrot.slane %v103, 1
  %v105 = vadd.f32 %v103, %v104
  %v106 = vrot.slane %v67, 4
  %v107 = vadd.f32 %v67, %v106
  %v108 = vrot.slane %v107, 2
  %v109 = vadd.f32 %v107, %v108
  %v110 = vrot.slane %v109, 1
  %v111 = vadd.f32 %v109, %v110
  %v112 = vrot.slane %v80, 4
  %v113 = vadd.f32 %v80, %v112
  %v114 = vrot.slane %v113, 2
  %v115 = vadd.f32 %v113, %v114
  %v116 = vrot.slane %v115, 1
  %v117 = vadd.f32 %v115, %v116
  %v118 = vrot.slane %v93, 4
  %v119 = vadd.f32 %v93, %v118
  %v120 = vrot.slane %v119, 2
  %v121 = vadd.f32 %v119, %v120
  %v122 = vrot.slane %v121, 1
  %v123 = vadd.f32 %v121, %v122
  %v124 = vmul.f32 %v54, %v54
  %v125 = vmul.f32 %v67, %v67
  %v126 = vmul.f32 %v80, %v80
  %v127 = vmul.f32 %v93, %v93
  %v128 = vrot.slane %v124, 4
  %v129 = vadd.f32 %v124, %v128
  %v130 = vrot.slane %v129, 2
  %v131 = vadd.f32 %v129, %v130
  %v132 = vrot.slane %v131, 1
  %v133 = vadd.f32 %v131, %v132
  %v134 = vrot.slane %v125, 4
  %v135 = vadd.f32 %v125, %v134
  %v136 = vrot.slane %v135, 2
  %v137 = vadd.f32 %v135, %v136
  %v138 = vrot.slane %v137, 1
  %v139 = vadd.f32 %v137, %v138
  %v140 = vrot.slane %v126, 4
  %v141 = vadd.f32 %v126, %v140
  %v142 = vrot.slane %v141, 2
  %v143 = vadd.f32 %v141, %v142
  %v144 = vrot.slane %v143, 1
  %v145 = vadd.f32 %v143, %v144
  %v146 = vrot.slane %v127, 4
  %v147 = vadd.f32 %v127, %v146
  %v148 = vrot.slane %v147, 2
  %v149 = vadd.f32 %v147, %v148
  %v150 = vrot.slane %v149, 1
  %v151 = vadd.f32 %v149, %v150
  %vm152 = vcmask 1040384
  %v153 = vsel %vm152, %v105, %v133
  %v154 = vsel %vm152, %v111, %v139
  %v155 = vsel %vm152, %v117, %v145
  %v156 = vsel %vm152, %v123, %v151
  %v161 = vrot.slane %v154, 6
  %v162 = vrot.slane %v155, 4
  %v163 = vrot.slane %v156, 2
  %vm164 = vcmask 1041408
  %v165 = vsel %vm164, %v153, %v161
  %vm166 = vcmask 1045508
  %v167 = vsel %vm166, %v162, %v163
  %v168 = vsel %vm31, %v165, %v167
  %170 = vst [vmem:[%s3] sm:$0xff] %v168
  // Predicated region
  $region10: #{_lambda_.5} parent=0 // pred_check
    _
  $region11: #{_lambda_.5} parent=0 // pred_check_branch
    %172 = sbr.rel (0) target = $region13
  $region12: #{_lambda_.5} parent=0 // pred_region
    _
  $region13: #{_lambda_.5} parent=0 // pred_fallthru
    _
  // Predicated region
  $region14: #{_lambda_.5} parent=0 // pred_check
    _
  $region15: #{_lambda_.5} parent=0 // pred_check_branch
    %174 = sbr.rel (0) target = $region17
  $region16: #{_lambda_.5} parent=0 // pred_region
    _
  $region17: #{_lambda_.5} parent=0 // pred_fallthru
    _
  // Predicated region
  $region18: #{_lambda_.5} parent=0 // pred_check
    _
  $region19: #{_lambda_.5} parent=0 // pred_check_branch
    %176 = sbr.rel (0) target = $region21
  $region20: #{_lambda_.5} parent=0 // pred_region
    _
  $region21: #{_lambda_.5} parent=0 // pred_fallthru
    _
  // Predicated region
  $region22: #{_lambda_.5} parent=0 // pred_check
    _
  $region23: #{_lambda_.5} parent=0 // pred_check_branch
    %178 = sbr.rel (0) target = $region25
  $region24: #{_lambda_.5} parent=0 // pred_region
    _
  $region25: #{_lambda_.5} parent=0 // pred_fallthru
    _

// kernel: _lambda_.6
$region0: #{_lambda_.6}
  #allocation0 [shape = 'u32[]', space=smem, size = 0x4, offset = 0x4, fixed_abs, tag = 'smem constant byte address 0x4 - core index']
  #allocation1 [shape = 'u32[72,128]{1,0:T(1,128)}', space=vmem, size = 0x9000, scoped, tag = 'internal scratch']
  %s0 = inlined_call_operand.vmem [shape: f32[1,8,512], index: 0, kind: input, shape index: {}]
  %s1 = inlined_call_operand.vmem [shape: f32[1,512], index: 1, kind: input, shape index: {}]
  %s2 = inlined_call_operand.vmem [shape: f32[1,512], index: 2, kind: input, shape index: {}]
  %s3 = inlined_call_operand.vmem [shape: bf16[1,8,512], index: 3, kind: output, shape index: {}]
  %s4 = sld [smem:[#allocation0]]
  $region22: #{_lambda_.6} parent=0
    _
  %s6 = ssub.s32 1, %s4
  %s7 = scalar_select 0, %s6, %s4
  // Predicated region
  $region2: #{_lambda_.6} parent=0 // pred_check
    _
  $region3: #{_lambda_.6} parent=0 // pred_check_branch
    %9 = sbr.rel (0) target = $region5
  $region4: #{_lambda_.6} parent=0 // pred_region
    _
  $region5: #{_lambda_.6} parent=0 // pred_fallthru
    _
  // Predicated region
  $region6: #{_lambda_.6} parent=0 // pred_check
    _
  $region7: #{_lambda_.6} parent=0 // pred_check_branch
    %11 = sbr.rel (0) target = $region9
  $region8: #{_lambda_.6} parent=0 // pred_region
    _
  $region9: #{_lambda_.6} parent=0 // pred_fallthru
    _
  // Predicated region
  $region10: #{_lambda_.6} parent=0 // pred_check
    _
  $region11: #{_lambda_.6} parent=0 // pred_check_branch
    %13 = sbr.rel (0) target = $region13
  $region12: #{_lambda_.6} parent=0 // pred_region
    _
  $region13: #{_lambda_.6} parent=0 // pred_fallthru
    _
  %v14 = vld [vmem:[%s0] sm:$0xff]
  %v15 = vld [vmem:[%s0 + $0x8] sm:$0xff]
  %v16 = vld [vmem:[%s0 + $0x10] sm:$0xff]
  %v17 = vld [vmem:[%s0 + $0x18] sm:$0xff]
  %v18 = vld [vmem:[%s1] sm:$0xf]
  %v20 = vperm.slane %v18, 0
  %v21 = vperm.slane %v18, 1
  %v22 = vperm.slane %v18, 2
  %v23 = vperm.slane %v18, 3
  %v28 = vsub.f32 %v14, %v20
  %v29 = vsub.f32 %v15, %v21
  %v30 = vsub.f32 %v16, %v22
  %v31 = vsub.f32 %v17, %v23
  %v32 = vld [vmem:[%s2] sm:$0xf]
  %v34 = vperm.slane %v32, 0
  %v35 = vperm.slane %v32, 1
  %v36 = vperm.slane %v32, 2
  %v37 = vperm.slane %v32, 3
  %v42 = vmul.f32 %v28, %v34
  %v43 = vmul.f32 %v29, %v35
  %v44 = vmul.f32 %v30, %v36
  %v45 = vmul.f32 %v31, %v37
  %v46 = vmax.f32 %v42, 0.0
  %v47 = vmax.f32 %v43, 0.0
  %v48 = vmax.f32 %v44, 0.0
  %v49 = vmax.f32 %v45, 0.0
  %v50 = vpack.c.bf16 %v47, %v46
  %v51 = vpack.c.bf16 %v49, %v48
  %52 = vst [vmem:[%s3] sm:$0xff] %v50
  %53 = vst [vmem:[%s3 + $0x8] sm:$0xff] %v51
  // Predicated region
  $region14: #{_lambda_.6} parent=0 // pred_check
    _
  $region15: #{_lambda_.6} parent=0 // pred_check_branch
    %55 = sbr.rel (0) target = $region17
  $region16: #{_lambda_.6} parent=0 // pred_region
    _
  $region17: #{_lambda_.6} parent=0 // pred_fallthru
    _
  // Predicated region
  $region18: #{_lambda_.6} parent=0 // pred_check
    _
  $region19: #{_lambda_.6} parent=0 // pred_check_branch
    %57 = sbr.rel (0) target = $region21
  $region20: #{_lambda_.6} parent=0 // pred_region
    _
  $region21: #{_lambda_.6} parent=0 // pred_fallthru
    _

// kernel: _lambda_.7
$region0: #{_lambda_.7}
  #allocation0 [shape = 'u32[]', space=smem, size = 0x4, offset = 0x4, fixed_abs, tag = 'smem constant byte address 0x4 - core index']
  #allocation1 [shape = 'u32[72,128]{1,0:T(1,128)}', space=vmem, size = 0x9000, scoped, tag = 'internal scratch']
  %s0 = inlined_call_operand.vmem [shape: bf16[4,32,128], index: 0, kind: input, shape index: {}]
  %s1 = inlined_call_operand.vmem [shape: bf16[4,128,128], index: 1, kind: input, shape index: {}]
  %s2 = inlined_call_operand.vmem [shape: f32[4,32,128], index: 2, kind: output, shape index: {0}]
  %s3 = inlined_call_operand.vmem [shape: f32[4,1,2,128], index: 3, kind: output, shape index: {1}]
  %4 = xla_tuple %s2, %s3
  %s5 = sld [smem:[#allocation0]]
  $region49: #{_lambda_.7} parent=0
    _
  %s7 = ssub.s32 1, %s5
  %s8 = scalar_select 0, %s7, %s5
  loop: start=0, step=1, limit=6
  $region2: #{_lambda_.7} parent=0 // loop_pre_header
    _
  $region3: #{_lambda_.7} parent=0 // loop_header
    %s10 = sphi 0, %s14
    %p11 = scmp.ge.s32.totalorder %s10, 6
    %s17 = sphi 0, %s29
    %s18 = sphi 0, %s25
    %s19 = sphi 0, %s17
    %s20 = sphi 0, %s18
    %s21 = sphi 0, %s19
    %s22 = sphi 0, %s20
    %s34 = sphi 0, %s36
    %s37 = sphi 0, %s34
    %s38 = sphi 0, %s37
    %s54 = sphi 0, %s38
    %s60 = sphi 0, %s62
    %s63 = sphi 0, %s60
    %s64 = sphi 0, %s63
    %s80 = sphi 0, %s64
    %s88 = sphi 0, %s90
    %s91 = sphi 0, %s88
    %s92 = sphi 0, %s91
    %s108 = sphi 0, %s92
    %s116 = sphi 0, %s118
    %s119 = sphi 0, %s116
    %s120 = sphi 0, %s119
    %s136 = sphi 0, %s120
  $region4: #{_lambda_.7} parent=0 // loop_header_branch
    %13 = sbr.rel (%p11) target = $region8
  $region5: #{_lambda_.7} parent=0 // loop_body
    %s15 = ssub.s32 %s10, 1
    %s16 = ssub.s32 %s10, 2
    %s23 = sadd.s32 1, %s18
    %p24 = scmp.ge.s32.totalorder %s23, 1
    %s25 = scalar_select %p24, 0, %s23
    %s26 = sadd.s32 1, %s17
    %s27 = scalar_select %p24, %s26, %s17
    %p28 = scmp.ge.s32.totalorder %s27, 4
    %s29 = scalar_select %p28, 0, %s27
    %s30 = ssub.s32 %s17, %s29
    %s31 = ssub.s32 %s18, %s25
    %s32 = sor.u32 %s30, %s31
    %p33 = scmp.eq.s32.totalorder %s32, 0
    %s35 = sadd.s32 %s34, 1
    %s36 = scalar_select %p33, %s34, %s35
    %p39 = pneg %p33
    %p40 = scmp.eq.s32.totalorder %s10, 3
    %p41 = por %p39, %p40
    %p42 = scmp.ne.s32.totalorder %s34, %s37
    %p43 = scmp.eq.s32.totalorder %s10, 0
    %p44 = por %p42, %p43
    %p45 = scmp.ne.s32.totalorder %s34, %s37
    %p46 = scmp.eq.s32.totalorder %s15, 3
    %p47 = por %p45, %p46
    %p48 = scmp.ne.s32.totalorder %s37, %s38
    %p49 = scmp.eq.s32.totalorder %s15, 0
    %p50 = por %p48, %p49
    %p51 = scmp.ne.s32.totalorder %s37, %s38
    %p52 = scmp.eq.s32.totalorder %s16, 3
    %p53 = por %p51, %p52
    %p55 = scmp.ne.s32.totalorder %s38, %s54
    %p56 = scmp.eq.s32.totalorder %s16, 0
    %p57 = por %p55, %p56
    %s58 = ssub.s32 %s17, %s29
    %p59 = scmp.eq.s32.totalorder %s58, 0
    %s61 = sadd.s32 %s60, 1
    %s62 = scalar_select %p59, %s60, %s61
    %p65 = pneg %p59
    %p66 = scmp.eq.s32.totalorder %s10, 3
    %p67 = por %p65, %p66
    %p68 = scmp.ne.s32.totalorder %s60, %s63
    %p69 = scmp.eq.s32.totalorder %s10, 0
    %p70 = por %p68, %p69
    %p71 = scmp.ne.s32.totalorder %s60, %s63
    %p72 = scmp.eq.s32.totalorder %s15, 3
    %p73 = por %p71, %p72
    %p74 = scmp.ne.s32.totalorder %s63, %s64
    %p75 = scmp.eq.s32.totalorder %s15, 0
    %p76 = por %p74, %p75
    %p77 = scmp.ne.s32.totalorder %s63, %s64
    %p78 = scmp.eq.s32.totalorder %s16, 3
    %p79 = por %p77, %p78
    %p81 = scmp.ne.s32.totalorder %s64, %s80
    %p82 = scmp.eq.s32.totalorder %s16, 0
    %p83 = por %p81, %p82
    %s84 = ssub.s32 %s17, %s29
    %s85 = ssub.s32 %s18, %s25
    %s86 = sor.u32 %s84, %s85
    %p87 = scmp.eq.s32.totalorder %s86, 0
    %s89 = sadd.s32 %s88, 1
    %s90 = scalar_select %p87, %s88, %s89
    %p93 = pneg %p87
    %p94 = scmp.eq.s32.totalorder %s10, 3
    %p95 = por %p93, %p94
    %p96 = scmp.ne.s32.totalorder %s88, %s91
    %p97 = scmp.eq.s32.totalorder %s10, 0
    %p98 = por %p96, %p97
    %p99 = scmp.ne.s32.totalorder %s88, %s91
    %p100 = scmp.eq.s32.totalorder %s15, 3
    %p101 = por %p99, %p100
    %p102 = scmp.ne.s32.totalorder %s91, %s92
    %p103 = scmp.eq.s32.totalorder %s15, 0
    %p104 = por %p102, %p103
    %p105 = scmp.ne.s32.totalorder %s91, %s92
    %p106 = scmp.eq.s32.totalorder %s16, 3
    %p107 = por %p105, %p106
    %p109 = scmp.ne.s32.totalorder %s92, %s108
    %p110 = scmp.eq.s32.totalorder %s16, 0
    %p111 = por %p109, %p110
    %s112 = ssub.s32 %s17, %s29
    %s113 = ssub.s32 %s18, %s25
    %s114 = sor.u32 %s112, %s113
    %p115 = scmp.eq.s32.totalorder %s114, 0
    %s117 = sadd.s32 %s116, 1
    %s118 = scalar_select %p115, %s116, %s117
    %p121 = pneg %p115
    %p122 = scmp.eq.s32.totalorder %s10, 3
    %p123 = por %p121, %p122
    %p124 = scmp.ne.s32.totalorder %s116, %s119
    %p125 = scmp.eq.s32.totalorder %s10, 0
    %p126 = por %p124, %p125
    %p127 = scmp.ne.s32.totalorder %s116, %s119
    %p128 = scmp.eq.s32.totalorder %s15, 3
    %p129 = por %p127, %p128
    %p130 = scmp.ne.s32.totalorder %s119, %s120
    %p131 = scmp.eq.s32.totalorder %s15, 0
    %p132 = por %p130, %p131
    %p133 = scmp.ne.s32.totalorder %s119, %s120
    %p134 = scmp.eq.s32.totalorder %s16, 3
    %p135 = por %p133, %p134
    %p137 = scmp.ne.s32.totalorder %s120, %s136
    %p138 = scmp.eq.s32.totalorder %s16, 0
    %p139 = por %p137, %p138
    %p140 = scmp.le.s32.totalorder 1, %s10
    %p141 = scmp.lt.s32.totalorder %s10, 5
    %p142 = pnand %p140, %p141
    %p143 = pneg %p142
    // Predicated region
    $region9: #{_lambda_.7} parent=5 // pred_check
      _
    $region10: #{_lambda_.7} parent=5 // pred_check_branch
      %145 = sbr.rel (%p142) target = $region12
    $region11: #{_lambda_.7} parent=5 // pred_region
      %s146 = ssub.s32 %s10, 1
    $region12: #{_lambda_.7} parent=5 // pred_fallthru
      _
    %p147 = scmp.lt.s32.totalorder %s10, 4
    // Predicated region
    $region13: #{_lambda_.7} parent=5 // pred_check
      %p148 = pneg %p147
    $region14: #{_lambda_.7} parent=5 // pred_check_branch
      %150 = sbr.rel (%p148) target = $region16
    $region15: #{_lambda_.7} parent=5 // pred_region
      // Predicated region
      $region17: #{_lambda_.7} parent=15 // pred_check
        %p151 = pneg %p44
      $region18: #{_lambda_.7} parent=15 // pred_check_branch
        %153 = sbr.rel (%p151) target = $region20
      $region19: #{_lambda_.7} parent=15 // pred_region
        %s154 = smul.u32 4, %s18
        %p155 = scmp.lt.s32.totalorder %s17, 3
        %s156 = scalar_select %p155, %s17, 3
        %p157 = scmp.lt.s32.totalorder %s154, 3
        %s158 = scalar_select %p157, %s154, 3
        %s159 = smul.addr %s156, 4
        %s160 = sadd.s32 %s158, %s159
        %s161 = smul.addr %s160, 4
        %s162 = scalar_lea.vmem %s0, %s161
        %s163 = smul.u32 4, %s18
      $region20: #{_lambda_.7} parent=15 // pred_fallthru
        _
      // Predicated region
      $region21: #{_lambda_.7} parent=15 // pred_check
        %p164 = pneg %p70
      $region22: #{_lambda_.7} parent=15 // pred_check_branch
        %166 = sbr.rel (%p164) target = $region24
      $region23: #{_lambda_.7} parent=15 // pred_region
        %p167 = scmp.lt.s32.totalorder %s17, 3
        %s168 = scalar_select %p167, %s17, 3
        %s169 = smul.addr %s168, 16
        %s170 = smul.addr %s169, 4
        %s171 = scalar_lea.vmem %s1, %s170
      $region24: #{_lambda_.7} parent=15 // pred_fallthru
        _
    $region16: #{_lambda_.7} parent=5 // pred_fallthru
      _
    %p172 = scmp.le.s32.totalorder 1, %s10
    %p173 = scmp.lt.s32.totalorder %s10, 5
    %p174 = pnand %p172, %p173
    %p175 = pneg %p174
    // Predicated region
    $region25: #{_lambda_.7} parent=5 // pred_check
      _
    $region26: #{_lambda_.7} parent=5 // pred_check_branch
      %177 = sbr.rel (%p174) target = $region28
    $region27: #{_lambda_.7} parent=5 // pred_region
      %s178 = ssub.s32 %s10, 1
      %s179 = smul.u32 4, %s20
      %p180 = scmp.lt.s32.totalorder %s19, 3
      %s181 = scalar_select %p180, %s19, 3
      %p182 = scmp.lt.s32.totalorder %s179, 3
      %s183 = scalar_select %p182, %s179, 3
      %s184 = smul.addr %s181, 4
      %s185 = sadd.s32 %s183, %s184
      %s186 = smul.addr %s185, 4
      %s187 = scalar_lea.vmem %s0, %s186
      %p188 = pneg %p50
      %p189 = pneg %p47
      %p190 = scmp.lt.s32.totalorder %s19, 3
      %s191 = scalar_select %p190, %s19, 3
      %s192 = smul.addr %s191, 16
      %s193 = smul.addr %s192, 4
      %s194 = scalar_lea.vmem %s1, %s193
      %p195 = pneg %p76
      %p196 = pneg %p73
      %p197 = pneg %p104
      %p198 = pneg %p101
      %s199 = smul.u32 4, %s20
      %p200 = scmp.lt.s32.totalorder %s19, 3
      %s201 = scalar_select %p200, %s19, 3
      %p202 = scmp.lt.s32.totalorder %s199, 3
      %s203 = scalar_select %p202, %s199, 3
      %s204 = smul.addr %s201, 4
      %s205 = sadd.s32 %s203, %s204
      %s206 = smul.addr %s205, 8
      %s207 = scalar_lea.vmem %s2, %s206
      %p208 = pneg %p132
      %p209 = pneg %p129
      %p210 = scmp.lt.s32.totalorder %s19, 3
      %s211 = scalar_select %p210, %s19, 3
      %p212 = scmp.lt.s32.totalorder %s20, 0
      %s213 = scalar_select %p212, %s20, 0
      %s214 = sadd.s32 %s213, %s211
      %s215 = smul.addr %s214, 2
      %s216 = scalar_lea.vmem %s3, %s215
      %s217 = smul.u32 4, %s20
      %p218 = scmp.lt.s32.totalorder %s19, 3
      %s219 = scalar_select %p218, %s19, 3
      %p220 = scmp.lt.s32.totalorder %s217, 3
      %s221 = scalar_select %p220, %s217, 3
      %s222 = smul.addr %s219, 4
      %s223 = sadd.s32 %s221, %s222
      %s224 = smul.addr %s223, 4
      %s225 = scalar_lea.vmem %s0, %s224
      %s226 = smul.u32 4, %s20
      %p227 = scmp.lt.s32.totalorder %s19, 3
      %s228 = scalar_select %p227, %s19, 3
      %s229 = smul.addr %s228, 16
      %s230 = smul.addr %s229, 4
      %s231 = scalar_lea.vmem %s1, %s230
      %s232 = smul.u32 4, %s20
      %p233 = scmp.lt.s32.totalorder %s19, 3
      %s234 = scalar_select %p233, %s19, 3
      %p235 = scmp.lt.s32.totalorder %s232, 3
      %s236 = scalar_select %p235, %s232, 3
      %s237 = smul.addr %s234, 4
      %s238 = sadd.s32 %s236, %s237
      %s239 = smul.addr %s238, 8
      %s240 = scalar_lea.vmem %s2, %s239
      %s241 = smul.u32 4, %s20
      %p242 = scmp.lt.s32.totalorder %s19, 3
      %s243 = scalar_select %p242, %s19, 3
      %p244 = scmp.lt.s32.totalorder %s20, 0
      %s245 = scalar_select %p244, %s20, 0
      %s246 = sadd.s32 %s245, %s243
      %s247 = smul.addr %s246, 2
      %s248 = scalar_lea.vmem %s3, %s247
      %v249 = vld [vmem:[%s225] sm:$0xf]
      %v250 = vld [vmem:[%s225 + $0x4] sm:$0xf]
      %v251 = vld [vmem:[%s225 + $0x8] sm:$0xf]
      %v252 = vld [vmem:[%s225 + $0xc] sm:$0xf]
      %v253 = vld [vmem:[%s231] sm:$0xf]
      %v254 = vld [vmem:[%s231 + $0x4] sm:$0xf]
      %v255 = vld [vmem:[%s231 + $0x8] sm:$0xf]
      %v256 = vld [vmem:[%s231 + $0xc] sm:$0xf]
      %v257 = vld [vmem:[%s231 + $0x10] sm:$0xf]
      %v258 = vld [vmem:[%s231 + $0x14] sm:$0xf]
      %v259 = vld [vmem:[%s231 + $0x18] sm:$0xf]
      %v260 = vld [vmem:[%s231 + $0x1c] sm:$0xf]
      %v261 = vld [vmem:[%s231 + $0x20] sm:$0xf]
      %v262 = vld [vmem:[%s231 + $0x24] sm:$0xf]
      %v263 = vld [vmem:[%s231 + $0x28] sm:$0xf]
      %v264 = vld [vmem:[%s231 + $0x2c] sm:$0xf]
      %v265 = vld [vmem:[%s231 + $0x30] sm:$0xf]
      %v266 = vld [vmem:[%s231 + $0x34] sm:$0xf]
      %v267 = vld [vmem:[%s231 + $0x38] sm:$0xf]
      %v268 = vld [vmem:[%s231 + $0x3c] sm:$0xf]
      %v273 = vunpack.c.l.b16 %v249
      %v274 = vunpack.c.l.b16 %v250
      %v275 = vunpack.c.l.b16 %v251
      %v276 = vunpack.c.l.b16 %v252
      %v277 = vpack.c.b16 %v274, %v273
      %v278 = vpack.c.b16 %v276, %v275
      %v297 = vunpack.c.l.b16 %v253
      %v298 = vunpack.c.l.b16 %v254
      %v299 = vunpack.c.l.b16 %v255
      %v300 = vunpack.c.l.b16 %v256
      %v301 = vunpack.c.l.b16 %v257
      %v302 = vunpack.c.l.b16 %v258
      %v303 = vunpack.c.l.b16 %v259
      %v304 = vunpack.c.l.b16 %v260
      %v305 = vunpack.c.l.b16 %v261
      %v306 = vunpack.c.l.b16 %v262
      %v307 = vunpack.c.l.b16 %v263
      %v308 = vunpack.c.l.b16 %v264
      %v309 = vunpack.c.l.b16 %v265
      %v310 = vunpack.c.l.b16 %v266
      %v311 = vunpack.c.l.b16 %v267
      %v312 = vunpack.c.l.b16 %v268
      %v313 = vpack.c.b16 %v298, %v297
      %v314 = vpack.c.b16 %v300, %v299
      %v315 = vpack.c.b16 %v302, %v301
      %v316 = vpack.c.b16 %v304, %v303
      %v317 = vpack.c.b16 %v306, %v305
      %v318 = vpack.c.b16 %v308, %v307
      %v319 = vpack.c.b16 %v310, %v309
      %v320 = vpack.c.b16 %v312, %v311
      %329 = vmatpush.bf16.msra.mxu0 %v320
      %330 = vmatpush.bf16.msra.mxu0 %v319
      %331 = vmatpush.bf16.msra.mxu0 %v318
      %332 = vmatpush.bf16.msra.mxu0 %v317
      %333 = vmatpush.bf16.msra.mxu0 %v316
      %334 = vmatpush.bf16.msra.mxu0 %v315
      %335 = vmatpush.bf16.msra.mxu0 %v314
      %336 = vmatpush.bf16.msra.mxu0 %v313
      %337 = vmatmul.bf16.gmra.mxu0 %v277
      %v338 = vpop.f32.mrf.mxu0
      %v339 = vadd.f32 0.0, %v338
      %v340 = vpop.f32.mrf.mxu0
      %v341 = vadd.f32 0.0, %v340
      %342 = vmatmul.bf16.gmra.mxu0 %v278
      %v343 = vpop.f32.mrf.mxu0
      %v344 = vadd.f32 0.0, %v343
      %v345 = vpop.f32.mrf.mxu0
      %v346 = vadd.f32 0.0, %v345
      %347 = vdwg.mxu0
      %348 = vst [vmem:[%s240] sm:$0xff] %v339
      %349 = vst [vmem:[%s240 + $0x8] sm:$0xff] %v341
      %350 = vst [vmem:[%s240 + $0x10] sm:$0xff] %v344
      %351 = vst [vmem:[%s240 + $0x18] sm:$0xff] %v346
      %v352 = vadd.f32 %v339, %v341
      %v353 = vadd.f32 %v352, %v344
      %v354 = vadd.f32 %v353, %v346
      %v355 = vrot.slane %v354, 4
      %v356 = vadd.f32 %v354, %v355
      %v357 = vrot.slane %v356, 2
      %v358 = vadd.f32 %v356, %v357
      %v359 = vrot.slane %v358, 1
      %v360 = vadd.f32 %v358, %v359
      %v361 = vmul.f32 %v339, %v339
      %v362 = vmul.f32 %v341, %v341
      %v363 = vmul.f32 %v344, %v344
      %v364 = vmul.f32 %v346, %v346
      %v365 = vadd.f32 %v361, %v362
      %v366 = vadd.f32 %v365, %v363
      %v367 = vadd.f32 %v366, %v364
      %v368 = vrot.slane %v367, 4
      %v369 = vadd.f32 %v367, %v368
      %v370 = vrot.slane %v369, 2
      %v371 = vadd.f32 %v369, %v370
      %v372 = vrot.slane %v371, 1
      %v373 = vadd.f32 %v371, %v372
      %vm374 = vcmask 1040384
      %v375 = vsel %vm374, %v360, %v373
      %376 = vst [vmem:[%s248] sm:$0x3] %v375
      %s377 = smul.u32 4, %s20
      %p378 = scmp.lt.s32.totalorder %s19, 3
      %s379 = scalar_select %p378, %s19, 3
      %p380 = scmp.lt.s32.totalorder %s377, 3
      %s381 = scalar_select %p380, %s377, 3
      %s382 = smul.addr %s379, 4
      %s383 = sadd.s32 %s381, %s382
      %s384 = smul.addr %s383, 8
      %s385 = scalar_lea.vmem %s2, %s384
      %p386 = scmp.lt.s32.totalorder %s19, 3
      %s387 = scalar_select %p386, %s19, 3
      %p388 = scmp.lt.s32.totalorder %s20, 0
      %s389 = scalar_select %p388, %s20, 0
      %s390 = sadd.s32 %s389, %s387
      %s391 = smul.addr %s390, 2
      %s392 = scalar_lea.vmem %s3, %s391
      // Predicated region
      $region29: #{_lambda_.7} parent=27 // pred_check
        %p393 = pneg %p101
      $region30: #{_lambda_.7} parent=27 // pred_check_branch
        %395 = sbr.rel (%p393) target = $region32
      $region31: #{_lambda_.7} parent=27 // pred_region
        %s396 = smul.u32 4, %s20
      $region32: #{_lambda_.7} parent=27 // pred_fallthru
        _
      // Predicated region
      $region33: #{_lambda_.7} parent=27 // pred_check
        %p397 = pneg %p129
      $region34: #{_lambda_.7} parent=27 // pred_check_branch
        %399 = sbr.rel (%p397) target = $region36
      $region35: #{_lambda_.7} parent=27 // pred_region
        _
      $region36: #{_lambda_.7} parent=27 // pred_fallthru
        _
    $region28: #{_lambda_.7} parent=5 // pred_fallthru
      _
    %p400 = scmp.le.s32.totalorder 2, %s10
    // Predicated region
    $region37: #{_lambda_.7} parent=5 // pred_check
      %p401 = pneg %p400
    $region38: #{_lambda_.7} parent=5 // pred_check_branch
      %403 = sbr.rel (%p401) target = $region40
    $region39: #{_lambda_.7} parent=5 // pred_region
      %s404 = ssub.s32 %s10, 2
      // Predicated region
      $region41: #{_lambda_.7} parent=39 // pred_check
        %p405 = pneg %p107
      $region42: #{_lambda_.7} parent=39 // pred_check_branch
        %407 = sbr.rel (%p405) target = $region44
      $region43: #{_lambda_.7} parent=39 // pred_region
        %s408 = smul.u32 4, %s22
        %p409 = scmp.lt.s32.totalorder %s21, 3
        %s410 = scalar_select %p409, %s21, 3
        %p411 = scmp.lt.s32.totalorder %s408, 3
        %s412 = scalar_select %p411, %s408, 3
        %s413 = smul.addr %s410, 4
        %s414 = sadd.s32 %s412, %s413
        %s415 = smul.addr %s414, 8
        %s416 = scalar_lea.vmem %s2, %s415
      $region44: #{_lambda_.7} parent=39 // pred_fallthru
        _
      // Predicated region
      $region45: #{_lambda_.7} parent=39 // pred_check
        %p417 = pneg %p135
      $region46: #{_lambda_.7} parent=39 // pred_check_branch
        %419 = sbr.rel (%p417) target = $region48
      $region47: #{_lambda_.7} parent=39 // pred_region
        %p420 = scmp.lt.s32.totalorder %s21, 3
        %s421 = scalar_select %p420, %s21, 3
        %p422 = scmp.lt.s32.totalorder %s22, 0
        %s423 = scalar_select %p422, %s22, 0
        %s424 = sadd.s32 %s423, %s421
        %s425 = smul.addr %s424, 2
        %s426 = scalar_lea.vmem %s3, %s425
      $region48: #{_lambda_.7} parent=39 // pred_fallthru
        _
    $region40: #{_lambda_.7} parent=5 // pred_fallthru
      _
  $region6: #{_lambda_.7} parent=0 // loop_footer
    %s14 = sadd.s32 1, %s10
  $region7: #{_lambda_.7} parent=0 // loop_footer_branch
    %9 = sbr.rel target = $region3
  $region8: #{_lambda_.7} parent=0 // loop_exit
    _

// kernel: _lambda_.8
$region0: #{_lambda_.8}
  #allocation0 [shape = 'u32[]', space=smem, size = 0x4, offset = 0x4, fixed_abs, tag = 'smem constant byte address 0x4 - core index']
  #allocation1 [shape = 'u32[72,128]{1,0:T(1,128)}', space=vmem, size = 0x9000, scoped, tag = 'internal scratch']
  %s0 = inlined_call_operand.vmem [shape: f32[4,32,128], index: 0, kind: input, shape index: {}]
  %s1 = inlined_call_operand.vmem [shape: f32[1,128], index: 1, kind: input, shape index: {}]
  %s2 = inlined_call_operand.vmem [shape: f32[1,128], index: 2, kind: input, shape index: {}]
  %s3 = inlined_call_operand.vmem [shape: bf16[4,32,128], index: 3, kind: output, shape index: {}]
  %s4 = sld [smem:[#allocation0]]
  $region45: #{_lambda_.8} parent=0
    _
  %s6 = ssub.s32 1, %s4
  %s7 = scalar_select 0, %s6, %s4
  loop: start=0, step=1, limit=6
  $region2: #{_lambda_.8} parent=0 // loop_pre_header
    _
  $region3: #{_lambda_.8} parent=0 // loop_header
    %s9 = sphi 0, %s13
    %p10 = scmp.ge.s32.totalorder %s9, 6
    %s16 = sphi 0, %s28
    %s17 = sphi 0, %s24
    %s18 = sphi 0, %s16
    %s19 = sphi 0, %s17
    %s20 = sphi 0, %s18
    %s21 = sphi 0, %s19
    %s33 = sphi 0, %s35
    %s36 = sphi 0, %s33
    %s37 = sphi 0, %s36
    %s53 = sphi 0, %s37
    %s57 = sphi 0, %s57
    %s59 = sphi 0, %s57
    %s60 = sphi 0, %s59
    %s74 = sphi 0, %s60
    %s78 = sphi 0, %s78
    %s80 = sphi 0, %s78
    %s81 = sphi 0, %s80
    %s95 = sphi 0, %s81
    %s103 = sphi 0, %s105
    %s106 = sphi 0, %s103
    %s107 = sphi 0, %s106
    %s123 = sphi 0, %s107
  $region4: #{_lambda_.8} parent=0 // loop_header_branch
    %12 = sbr.rel (%p10) target = $region8
  $region5: #{_lambda_.8} parent=0 // loop_body
    %s14 = ssub.s32 %s9, 1
    %s15 = ssub.s32 %s9, 2
    %s22 = sadd.s32 1, %s17
    %p23 = scmp.ge.s32.totalorder %s22, 1
    %s24 = scalar_select %p23, 0, %s22
    %s25 = sadd.s32 1, %s16
    %s26 = scalar_select %p23, %s25, %s16
    %p27 = scmp.ge.s32.totalorder %s26, 4
    %s28 = scalar_select %p27, 0, %s26
    %s29 = ssub.s32 %s16, %s28
    %s30 = ssub.s32 %s17, %s24
    %s31 = sor.u32 %s29, %s30
    %p32 = scmp.eq.s32.totalorder %s31, 0
    %s34 = sadd.s32 %s33, 1
    %s35 = scalar_select %p32, %s33, %s34
    %p38 = pneg %p32
    %p39 = scmp.eq.s32.totalorder %s9, 3
    %p40 = por %p38, %p39
    %p41 = scmp.ne.s32.totalorder %s33, %s36
    %p42 = scmp.eq.s32.totalorder %s9, 0
    %p43 = por %p41, %p42
    %p44 = scmp.ne.s32.totalorder %s33, %s36
    %p45 = scmp.eq.s32.totalorder %s14, 3
    %p46 = por %p44, %p45
    %p47 = scmp.ne.s32.totalorder %s36, %s37
    %p48 = scmp.eq.s32.totalorder %s14, 0
    %p49 = por %p47, %p48
    %p50 = scmp.ne.s32.totalorder %s36, %s37
    %p51 = scmp.eq.s32.totalorder %s15, 3
    %p52 = por %p50, %p51
    %p54 = scmp.ne.s32.totalorder %s37, %s53
    %p55 = scmp.eq.s32.totalorder %s15, 0
    %p56 = por %p54, %p55
    %s58 = sadd.s32 %s57, 1
    %p61 = scmp.eq.s32.totalorder %s9, 3
    %p62 = scmp.ne.s32.totalorder %s57, %s59
    %p63 = scmp.eq.s32.totalorder %s9, 0
    %p64 = por %p62, %p63
    %p65 = scmp.ne.s32.totalorder %s57, %s59
    %p66 = scmp.eq.s32.totalorder %s14, 3
    %p67 = por %p65, %p66
    %p68 = scmp.ne.s32.totalorder %s59, %s60
    %p69 = scmp.eq.s32.totalorder %s14, 0
    %p70 = por %p68, %p69
    %p71 = scmp.ne.s32.totalorder %s59, %s60
    %p72 = scmp.eq.s32.totalorder %s15, 3
    %p73 = por %p71, %p72
    %p75 = scmp.ne.s32.totalorder %s60, %s74
    %p76 = scmp.eq.s32.totalorder %s15, 0
    %p77 = por %p75, %p76
    %s79 = sadd.s32 %s78, 1
    %p82 = scmp.eq.s32.totalorder %s9, 3
    %p83 = scmp.ne.s32.totalorder %s78, %s80
    %p84 = scmp.eq.s32.totalorder %s9, 0
    %p85 = por %p83, %p84
    %p86 = scmp.ne.s32.totalorder %s78, %s80
    %p87 = scmp.eq.s32.totalorder %s14, 3
    %p88 = por %p86, %p87
    %p89 = scmp.ne.s32.totalorder %s80, %s81
    %p90 = scmp.eq.s32.totalorder %s14, 0
    %p91 = por %p89, %p90
    %p92 = scmp.ne.s32.totalorder %s80, %s81
    %p93 = scmp.eq.s32.totalorder %s15, 3
    %p94 = por %p92, %p93
    %p96 = scmp.ne.s32.totalorder %s81, %s95
    %p97 = scmp.eq.s32.totalorder %s15, 0
    %p98 = por %p96, %p97
    %s99 = ssub.s32 %s16, %s28
    %s100 = ssub.s32 %s17, %s24
    %s101 = sor.u32 %s99, %s100
    %p102 = scmp.eq.s32.totalorder %s101, 0
    %s104 = sadd.s32 %s103, 1
    %s105 = scalar_select %p102, %s103, %s104
    %p108 = pneg %p102
    %p109 = scmp.eq.s32.totalorder %s9, 3
    %p110 = por %p108, %p109
    %p111 = scmp.ne.s32.totalorder %s103, %s106
    %p112 = scmp.eq.s32.totalorder %s9, 0
    %p113 = por %p111, %p112
    %p114 = scmp.ne.s32.totalorder %s103, %s106
    %p115 = scmp.eq.s32.totalorder %s14, 3
    %p116 = por %p114, %p115
    %p117 = scmp.ne.s32.totalorder %s106, %s107
    %p118 = scmp.eq.s32.totalorder %s14, 0
    %p119 = por %p117, %p118
    %p120 = scmp.ne.s32.totalorder %s106, %s107
    %p121 = scmp.eq.s32.totalorder %s15, 3
    %p122 = por %p120, %p121
    %p124 = scmp.ne.s32.totalorder %s107, %s123
    %p125 = scmp.eq.s32.totalorder %s15, 0
    %p126 = por %p124, %p125
    %p127 = scmp.le.s32.totalorder 1, %s9
    %p128 = scmp.lt.s32.totalorder %s9, 5
    %p129 = pnand %p127, %p128
    %p130 = pneg %p129
    // Predicated region
    $region9: #{_lambda_.8} parent=5 // pred_check
      _
    $region10: #{_lambda_.8} parent=5 // pred_check_branch
      %132 = sbr.rel (%p129) target = $region12
    $region11: #{_lambda_.8} parent=5 // pred_region
      %s133 = ssub.s32 %s9, 1
      // Predicated region
      $region13: #{_lambda_.8} parent=11 // pred_check
        %p134 = pneg %p70
      $region14: #{_lambda_.8} parent=11 // pred_check_branch
        %136 = sbr.rel (%p134) target = $region16
      $region15: #{_lambda_.8} parent=11 // pred_region
        _
      $region16: #{_lambda_.8} parent=11 // pred_fallthru
        _
      // Predicated region
      $region17: #{_lambda_.8} parent=11 // pred_check
        %p137 = pneg %p91
      $region18: #{_lambda_.8} parent=11 // pred_check_branch
        %139 = sbr.rel (%p137) target = $region20
      $region19: #{_lambda_.8} parent=11 // pred_region
        _
      $region20: #{_lambda_.8} parent=11 // pred_fallthru
        _
    $region12: #{_lambda_.8} parent=5 // pred_fallthru
      _
    %p140 = scmp.lt.s32.totalorder %s9, 4
    // Predicated region
    $region21: #{_lambda_.8} parent=5 // pred_check
      %p141 = pneg %p140
    $region22: #{_lambda_.8} parent=5 // pred_check_branch
      %143 = sbr.rel (%p141) target = $region24
    $region23: #{_lambda_.8} parent=5 // pred_region
      // Predicated region
      $region25: #{_lambda_.8} parent=23 // pred_check
        %p144 = pneg %p43
      $region26: #{_lambda_.8} parent=23 // pred_check_branch
        %146 = sbr.rel (%p144) target = $region28
      $region27: #{_lambda_.8} parent=23 // pred_region
        %s147 = smul.u32 4, %s17
        %p148 = scmp.lt.s32.totalorder %s16, 3
        %s149 = scalar_select %p148, %s16, 3
        %p150 = scmp.lt.s32.totalorder %s147, 3
        %s151 = scalar_select %p150, %s147, 3
        %s152 = smul.addr %s149, 4
        %s153 = sadd.s32 %s151, %s152
        %s154 = smul.addr %s153, 8
        %s155 = scalar_lea.vmem %s0, %s154
        %s156 = smul.u32 4, %s17
      $region28: #{_lambda_.8} parent=23 // pred_fallthru
        _
    $region24: #{_lambda_.8} parent=5 // pred_fallthru
      _
    %p157 = scmp.le.s32.totalorder 1, %s9
    %p158 = scmp.lt.s32.totalorder %s9, 5
    %p159 = pnand %p157, %p158
    %p160 = pneg %p159
    // Predicated region
    $region29: #{_lambda_.8} parent=5 // pred_check
      _
    $region30: #{_lambda_.8} parent=5 // pred_check_branch
      %162 = sbr.rel (%p159) target = $region32
    $region31: #{_lambda_.8} parent=5 // pred_region
      %s163 = ssub.s32 %s9, 1
      %s164 = smul.u32 4, %s19
      %p165 = scmp.lt.s32.totalorder %s18, 3
      %s166 = scalar_select %p165, %s18, 3
      %p167 = scmp.lt.s32.totalorder %s164, 3
      %s168 = scalar_select %p167, %s164, 3
      %s169 = smul.addr %s166, 4
      %s170 = sadd.s32 %s168, %s169
      %s171 = smul.addr %s170, 8
      %s172 = scalar_lea.vmem %s0, %s171
      %p173 = pneg %p49
      %p174 = pneg %p46
      %p175 = pneg %p70
      %p176 = pneg %p67
      %p177 = pneg %p91
      %p178 = pneg %p88
      %p179 = pneg %p119
      %p180 = pneg %p116
      %s181 = smul.u32 4, %s19
      %p182 = scmp.lt.s32.totalorder %s18, 3
      %s183 = scalar_select %p182, %s18, 3
      %p184 = scmp.lt.s32.totalorder %s181, 3
      %s185 = scalar_select %p184, %s181, 3
      %s186 = smul.addr %s183, 4
      %s187 = sadd.s32 %s185, %s186
      %s188 = smul.addr %s187, 4
      %s189 = scalar_lea.vmem %s3, %s188
      %s190 = smul.u32 4, %s19
      %p191 = scmp.lt.s32.totalorder %s18, 3
      %s192 = scalar_select %p191, %s18, 3
      %p193 = scmp.lt.s32.totalorder %s190, 3
      %s194 = scalar_select %p193, %s190, 3
      %s195 = smul.addr %s192, 4
      %s196 = sadd.s32 %s194, %s195
      %s197 = smul.addr %s196, 8
      %s198 = scalar_lea.vmem %s0, %s197
      %s199 = smul.u32 4, %s19
      %s200 = smul.u32 4, %s19
      %p201 = scmp.lt.s32.totalorder %s18, 3
      %s202 = scalar_select %p201, %s18, 3
      %p203 = scmp.lt.s32.totalorder %s200, 3
      %s204 = scalar_select %p203, %s200, 3
      %s205 = smul.addr %s202, 4
      %s206 = sadd.s32 %s204, %s205
      %s207 = smul.addr %s206, 4
      %s208 = scalar_lea.vmem %s3, %s207
      %s209 = smul.u32 4, %s19
      %v210 = vld [vmem:[%s198] sm:$0xff]
      %v211 = vld [vmem:[%s198 + $0x8] sm:$0xff]
      %v212 = vld [vmem:[%s198 + $0x10] sm:$0xff]
      %v213 = vld [vmem:[%s198 + $0x18] sm:$0xff]
      %v214 = vld [vmem:[%s1] sm:$0x1]
      %v216 = vperm.slane %v214, 0
      %v218 = vsub.f32 %v210, %v216
      %v219 = vsub.f32 %v211, %v216
      %v220 = vsub.f32 %v212, %v216
      %v221 = vsub.f32 %v213, %v216
      %v222 = vld [vmem:[%s2] sm:$0x1]
      %v224 = vperm.slane %v222, 0
      %v226 = vmul.f32 %v218, %v224
      %v227 = vmul.f32 %v219, %v224
      %v228 = vmul.f32 %v220, %v224
      %v229 = vmul.f32 %v221, %v224
      %v230 = vmax.f32 %v226, 0.0
      %v231 = vmax.f32 %v227, 0.0
      %v232 = vmax.f32 %v228, 0.0
      %v233 = vmax.f32 %v229, 0.0
      %v234 = vpack.c.bf16 %v230, %v230
      %v235 = vpack.c.bf16 %v231, %v231
      %v236 = vpack.c.bf16 %v232, %v232
      %v237 = vpack.c.bf16 %v233, %v233
      %238 = vst [vmem:[%s208] sm:$0xf] %v234
      %239 = vst [vmem:[%s208 + $0x4] sm:$0xf] %v235
      %240 = vst [vmem:[%s208 + $0x8] sm:$0xf] %v236
      %241 = vst [vmem:[%s208 + $0xc] sm:$0xf] %v237
      %s242 = smul.u32 4, %s19
      %p243 = scmp.lt.s32.totalorder %s18, 3
      %s244 = scalar_select %p243, %s18, 3
      %p245 = scmp.lt.s32.totalorder %s242, 3
      %s246 = scalar_select %p245, %s242, 3
      %s247 = smul.addr %s244, 4
      %s248 = sadd.s32 %s246, %s247
      %s249 = smul.addr %s248, 4
      %s250 = scalar_lea.vmem %s3, %s249
      // Predicated region
      $region33: #{_lambda_.8} parent=31 // pred_check
        %p251 = pneg %p116
      $region34: #{_lambda_.8} parent=31 // pred_check_branch
        %253 = sbr.rel (%p251) target = $region36
      $region35: #{_lambda_.8} parent=31 // pred_region
        %s254 = smul.u32 4, %s19
      $region36: #{_lambda_.8} parent=31 // pred_fallthru
        _
    $region32: #{_lambda_.8} parent=5 // pred_fallthru
      _
    %p255 = scmp.le.s32.totalorder 2, %s9
    // Predicated region
    $region37: #{_lambda_.8} parent=5 // pred_check
      %p256 = pneg %p255
    $region38: #{_lambda_.8} parent=5 // pred_check_branch
      %258 = sbr.rel (%p256) target = $region40
    $region39: #{_lambda_.8} parent=5 // pred_region
      %s259 = ssub.s32 %s9, 2
      // Predicated region
      $region41: #{_lambda_.8} parent=39 // pred_check
        %p260 = pneg %p122
      $region42: #{_lambda_.8} parent=39 // pred_check_branch
        %262 = sbr.rel (%p260) target = $region44
      $region43: #{_lambda_.8} parent=39 // pred_region
        %s263 = smul.u32 4, %s21
        %p264 = scmp.lt.s32.totalorder %s20, 3
        %s265 = scalar_select %p264, %s20, 3
        %p266 = scmp.lt.s32.totalorder %s263, 3
        %s267 = scalar_select %p266, %s263, 3
        %s268 = smul.addr %s265, 4
        %s269 = sadd.s32 %s267, %s268
        %s270 = smul.addr %s269, 4
        %s271 = scalar_lea.vmem %s3, %s270
      $region44: #{_lambda_.8} parent=39 // pred_fallthru
        _
    $region40: #{_lambda_.8} parent=5 // pred_fallthru
      _
  $region6: #{_lambda_.8} parent=0 // loop_footer
    %s13 = sadd.s32 1, %s9
  $region7: #{_lambda_.8} parent=0 // loop_footer_branch
    %8 = sbr.rel target = $region3
  $region8: #{_lambda_.8} parent=0 // loop_exit
    _

// kernel: _lambda_.9
$region0: #{_lambda_.9}
  #allocation0 [shape = 'u32[]', space=smem, size = 0x4, offset = 0x4, fixed_abs, tag = 'smem constant byte address 0x4 - core index']
  #allocation1 [shape = 'u32[72,128]{1,0:T(1,128)}', space=vmem, size = 0x9000, scoped, tag = 'internal scratch']
  %s0 = inlined_call_operand.vmem [shape: bf16[4,128,64], index: 0, kind: input, shape index: {}]
  %s1 = inlined_call_operand.vmem [shape: bf16[4,64,128], index: 1, kind: input, shape index: {}]
  %s2 = inlined_call_operand.vmem [shape: f32[4,128,128], index: 2, kind: output, shape index: {}]
  %s3 = sld [smem:[#allocation0]]
  $region41: #{_lambda_.9} parent=0
    _
  %s5 = ssub.s32 1, %s3
  %s6 = scalar_select 0, %s5, %s3
  loop: start=0, step=1, limit=6
  $region2: #{_lambda_.9} parent=0 // loop_pre_header
    _
  $region3: #{_lambda_.9} parent=0 // loop_header
    %s8 = sphi 0, %s12
    %p9 = scmp.ge.s32.totalorder %s8, 6
    %s15 = sphi 0, %s27
    %s16 = sphi 0, %s23
    %s17 = sphi 0, %s15
    %s18 = sphi 0, %s16
    %s19 = sphi 0, %s17
    %s20 = sphi 0, %s18
    %s32 = sphi 0, %s34
    %s35 = sphi 0, %s32
    %s36 = sphi 0, %s35
    %s52 = sphi 0, %s36
    %s58 = sphi 0, %s60
    %s61 = sphi 0, %s58
    %s62 = sphi 0, %s61
    %s78 = sphi 0, %s62
    %s86 = sphi 0, %s88
    %s89 = sphi 0, %s86
    %s90 = sphi 0, %s89
    %s106 = sphi 0, %s90
  $region4: #{_lambda_.9} parent=0 // loop_header_branch
    %11 = sbr.rel (%p9) target = $region8
  $region5: #{_lambda_.9} parent=0 // loop_body
    %s13 = ssub.s32 %s8, 1
    %s14 = ssub.s32 %s8, 2
    %s21 = sadd.s32 1, %s16
    %p22 = scmp.ge.s32.totalorder %s21, 1
    %s23 = scalar_select %p22, 0, %s21
    %s24 = sadd.s32 1, %s15
    %s25 = scalar_select %p22, %s24, %s15
    %p26 = scmp.ge.s32.totalorder %s25, 4
    %s27 = scalar_select %p26, 0, %s25
    %s28 = ssub.s32 %s15, %s27
    %s29 = ssub.s32 %s16, %s23
    %s30 = sor.u32 %s28, %s29
    %p31 = scmp.eq.s32.totalorder %s30, 0
    %s33 = sadd.s32 %s32, 1
    %s34 = scalar_select %p31, %s32, %s33
    %p37 = pneg %p31
    %p38 = scmp.eq.s32.totalorder %s8, 3
    %p39 = por %p37, %p38
    %p40 = scmp.ne.s32.totalorder %s32, %s35
    %p41 = scmp.eq.s32.totalorder %s8, 0
    %p42 = por %p40, %p41
    %p43 = scmp.ne.s32.totalorder %s32, %s35
    %p44 = scmp.eq.s32.totalorder %s13, 3
    %p45 = por %p43, %p44
    %p46 = scmp.ne.s32.totalorder %s35, %s36
    %p47 = scmp.eq.s32.totalorder %s13, 0
    %p48 = por %p46, %p47
    %p49 = scmp.ne.s32.totalorder %s35, %s36
    %p50 = scmp.eq.s32.totalorder %s14, 3
    %p51 = por %p49, %p50
    %p53 = scmp.ne.s32.totalorder %s36, %s52
    %p54 = scmp.eq.s32.totalorder %s14, 0
    %p55 = por %p53, %p54
    %s56 = ssub.s32 %s15, %s27
    %p57 = scmp.eq.s32.totalorder %s56, 0
    %s59 = sadd.s32 %s58, 1
    %s60 = scalar_select %p57, %s58, %s59
    %p63 = pneg %p57
    %p64 = scmp.eq.s32.totalorder %s8, 3
    %p65 = por %p63, %p64
    %p66 = scmp.ne.s32.totalorder %s58, %s61
    %p67 = scmp.eq.s32.totalorder %s8, 0
    %p68 = por %p66, %p67
    %p69 = scmp.ne.s32.totalorder %s58, %s61
    %p70 = scmp.eq.s32.totalorder %s13, 3
    %p71 = por %p69, %p70
    %p72 = scmp.ne.s32.totalorder %s61, %s62
    %p73 = scmp.eq.s32.totalorder %s13, 0
    %p74 = por %p72, %p73
    %p75 = scmp.ne.s32.totalorder %s61, %s62
    %p76 = scmp.eq.s32.totalorder %s14, 3
    %p77 = por %p75, %p76
    %p79 = scmp.ne.s32.totalorder %s62, %s78
    %p80 = scmp.eq.s32.totalorder %s14, 0
    %p81 = por %p79, %p80
    %s82 = ssub.s32 %s15, %s27
    %s83 = ssub.s32 %s16, %s23
    %s84 = sor.u32 %s82, %s83
    %p85 = scmp.eq.s32.totalorder %s84, 0
    %s87 = sadd.s32 %s86, 1
    %s88 = scalar_select %p85, %s86, %s87
    %p91 = pneg %p85
    %p92 = scmp.eq.s32.totalorder %s8, 3
    %p93 = por %p91, %p92
    %p94 = scmp.ne.s32.totalorder %s86, %s89
    %p95 = scmp.eq.s32.totalorder %s8, 0
    %p96 = por %p94, %p95
    %p97 = scmp.ne.s32.totalorder %s86, %s89
    %p98 = scmp.eq.s32.totalorder %s13, 3
    %p99 = por %p97, %p98
    %p100 = scmp.ne.s32.totalorder %s89, %s90
    %p101 = scmp.eq.s32.totalorder %s13, 0
    %p102 = por %p100, %p101
    %p103 = scmp.ne.s32.totalorder %s89, %s90
    %p104 = scmp.eq.s32.totalorder %s14, 3
    %p105 = por %p103, %p104
    %p107 = scmp.ne.s32.totalorder %s90, %s106
    %p108 = scmp.eq.s32.totalorder %s14, 0
    %p109 = por %p107, %p108
    %p110 = scmp.le.s32.totalorder 1, %s8
    %p111 = scmp.lt.s32.totalorder %s8, 5
    %p112 = pnand %p110, %p111
    %p113 = pneg %p112
    // Predicated region
    $region9: #{_lambda_.9} parent=5 // pred_check
      _
    $region10: #{_lambda_.9} parent=5 // pred_check_branch
      %115 = sbr.rel (%p112) target = $region12
    $region11: #{_lambda_.9} parent=5 // pred_region
      %s116 = ssub.s32 %s8, 1
    $region12: #{_lambda_.9} parent=5 // pred_fallthru
      _
    %p117 = scmp.lt.s32.totalorder %s8, 4
    // Predicated region
    $region13: #{_lambda_.9} parent=5 // pred_check
      %p118 = pneg %p117
    $region14: #{_lambda_.9} parent=5 // pred_check_branch
      %120 = sbr.rel (%p118) target = $region16
    $region15: #{_lambda_.9} parent=5 // pred_region
      // Predicated region
      $region17: #{_lambda_.9} parent=15 // pred_check
        %p121 = pneg %p42
      $region18: #{_lambda_.9} parent=15 // pred_check_branch
        %123 = sbr.rel (%p121) target = $region20
      $region19: #{_lambda_.9} parent=15 // pred_region
        %s124 = smul.u32 16, %s16
        %p125 = scmp.lt.s32.totalorder %s15, 3
        %s126 = scalar_select %p125, %s15, 3
        %p127 = scmp.lt.s32.totalorder %s124, 15
        %s128 = scalar_select %p127, %s124, 15
        %s129 = smul.addr %s126, 16
        %s130 = sadd.s32 %s128, %s129
        %s131 = smul.addr %s130, 4
        %s132 = scalar_lea.vmem %s0, %s131
        %s133 = smul.u32 16, %s16
      $region20: #{_lambda_.9} parent=15 // pred_fallthru
        _
      // Predicated region
      $region21: #{_lambda_.9} parent=15 // pred_check
        %p134 = pneg %p68
      $region22: #{_lambda_.9} parent=15 // pred_check_branch
        %136 = sbr.rel (%p134) target = $region24
      $region23: #{_lambda_.9} parent=15 // pred_region
        %p137 = scmp.lt.s32.totalorder %s15, 3
        %s138 = scalar_select %p137, %s15, 3
        %s139 = smul.addr %s138, 8
        %s140 = smul.addr %s139, 4
        %s141 = scalar_lea.vmem %s1, %s140
      $region24: #{_lambda_.9} parent=15 // pred_fallthru
        _
    $region16: #{_lambda_.9} parent=5 // pred_fallthru
      _
    %p142 = scmp.le.s32.totalorder 1, %s8
    %p143 = scmp.lt.s32.totalorder %s8, 5
    %p144 = pnand %p142, %p143
    %p145 = pneg %p144
    // Predicated region
    $region25: #{_lambda_.9} parent=5 // pred_check
      _
    $region26: #{_lambda_.9} parent=5 // pred_check_branch
      %147 = sbr.rel (%p144) target = $region28
    $region27: #{_lambda_.9} parent=5 // pred_region
      %s148 = ssub.s32 %s8, 1
      %s149 = smul.u32 16, %s18
      %p150 = scmp.lt.s32.totalorder %s17, 3
      %s151 = scalar_select %p150, %s17, 3
      %p152 = scmp.lt.s32.totalorder %s149, 15
      %s153 = scalar_select %p152, %s149, 15
      %s154 = smul.addr %s151, 16
      %s155 = sadd.s32 %s153, %s154
      %s156 = smul.addr %s155, 4
      %s157 = scalar_lea.vmem %s0, %s156
      %p158 = pneg %p48
      %p159 = pneg %p45
      %p160 = scmp.lt.s32.totalorder %s17, 3
      %s161 = scalar_select %p160, %s17, 3
      %s162 = smul.addr %s161, 8
      %s163 = smul.addr %s162, 4
      %s164 = scalar_lea.vmem %s1, %s163
      %p165 = pneg %p74
      %p166 = pneg %p71
      %p167 = pneg %p102
      %p168 = pneg %p99
      %s169 = smul.u32 16, %s18
      %p170 = scmp.lt.s32.totalorder %s17, 3
      %s171 = scalar_select %p170, %s17, 3
      %p172 = scmp.lt.s32.totalorder %s169, 15
      %s173 = scalar_select %p172, %s169, 15
      %s174 = smul.addr %s171, 16
      %s175 = sadd.s32 %s173, %s174
      %s176 = smul.addr %s175, 8
      %s177 = scalar_lea.vmem %s2, %s176
      %s178 = smul.u32 16, %s18
      %p179 = scmp.lt.s32.totalorder %s17, 3
      %s180 = scalar_select %p179, %s17, 3
      %p181 = scmp.lt.s32.totalorder %s178, 15
      %s182 = scalar_select %p181, %s178, 15
      %s183 = smul.addr %s180, 16
      %s184 = sadd.s32 %s182, %s183
      %s185 = smul.addr %s184, 4
      %s186 = scalar_lea.vmem %s0, %s185
      %s187 = smul.u32 16, %s18
      %p188 = scmp.lt.s32.totalorder %s17, 3
      %s189 = scalar_select %p188, %s17, 3
      %s190 = smul.addr %s189, 8
      %s191 = smul.addr %s190, 4
      %s192 = scalar_lea.vmem %s1, %s191
      %s193 = smul.u32 16, %s18
      %p194 = scmp.lt.s32.totalorder %s17, 3
      %s195 = scalar_select %p194, %s17, 3
      %p196 = scmp.lt.s32.totalorder %s193, 15
      %s197 = scalar_select %p196, %s193, 15
      %s198 = smul.addr %s195, 16
      %s199 = sadd.s32 %s197, %s198
      %s200 = smul.addr %s199, 8
      %s201 = scalar_lea.vmem %s2, %s200
      %s202 = smul.u32 16, %s18
      %v204 = vld [vmem:[%s186] sm:$0xf]
      %v205 = vld [vmem:[%s186 + $0x4] sm:$0xf]
      %v206 = vld [vmem:[%s186 + $0x8] sm:$0xf]
      %v207 = vld [vmem:[%s186 + $0xc] sm:$0xf]
      %v208 = vld [vmem:[%s186 + $0x10] sm:$0xf]
      %v209 = vld [vmem:[%s186 + $0x14] sm:$0xf]
      %v210 = vld [vmem:[%s186 + $0x18] sm:$0xf]
      %v211 = vld [vmem:[%s186 + $0x1c] sm:$0xf]
      %v212 = vld [vmem:[%s186 + $0x20] sm:$0xf]
      %v213 = vld [vmem:[%s186 + $0x24] sm:$0xf]
      %v214 = vld [vmem:[%s186 + $0x28] sm:$0xf]
      %v215 = vld [vmem:[%s186 + $0x2c] sm:$0xf]
      %v216 = vld [vmem:[%s186 + $0x30] sm:$0xf]
      %v217 = vld [vmem:[%s186 + $0x34] sm:$0xf]
      %v218 = vld [vmem:[%s186 + $0x38] sm:$0xf]
      %v219 = vld [vmem:[%s186 + $0x3c] sm:$0xf]
      %v220 = vld [vmem:[%s192] sm:$0xf]
      %v221 = vld [vmem:[%s192 + $0x4] sm:$0xf]
      %v222 = vld [vmem:[%s192 + $0x8] sm:$0xf]
      %v223 = vld [vmem:[%s192 + $0xc] sm:$0xf]
      %v224 = vld [vmem:[%s192 + $0x10] sm:$0xf]
      %v225 = vld [vmem:[%s192 + $0x14] sm:$0xf]
      %v226 = vld [vmem:[%s192 + $0x18] sm:$0xf]
      %v227 = vld [vmem:[%s192 + $0x1c] sm:$0xf]
      %v244 = vunpack.c.l.b16 %v204
      %v245 = vunpack.c.l.b16 %v205
      %v246 = vunpack.c.l.b16 %v206
      %v247 = vunpack.c.l.b16 %v207
      %v248 = vunpack.c.l.b16 %v208
      %v249 = vunpack.c.l.b16 %v209
      %v250 = vunpack.c.l.b16 %v210
      %v251 = vunpack.c.l.b16 %v211
      %v252 = vunpack.c.l.b16 %v212
      %v253 = vunpack.c.l.b16 %v213
      %v254 = vunpack.c.l.b16 %v214
      %v255 = vunpack.c.l.b16 %v215
      %v256 = vunpack.c.l.b16 %v216
      %v257 = vunpack.c.l.b16 %v217
      %v258 = vunpack.c.l.b16 %v218
      %v259 = vunpack.c.l.b16 %v219
      %v260 = vpack.c.b16 %v245, %v244
      %v261 = vpack.c.b16 %v247, %v246
      %v262 = vpack.c.b16 %v249, %v248
      %v263 = vpack.c.b16 %v251, %v250
      %v264 = vpack.c.b16 %v253, %v252
      %v265 = vpack.c.b16 %v255, %v254
      %v266 = vpack.c.b16 %v257, %v256
      %v267 = vpack.c.b16 %v259, %v258
      %v276 = vunpack.c.l.b16 %v220
      %v277 = vunpack.c.l.b16 %v221
      %v278 = vunpack.c.l.b16 %v222
      %v279 = vunpack.c.l.b16 %v223
      %v280 = vunpack.c.l.b16 %v224
      %v281 = vunpack.c.l.b16 %v225
      %v282 = vunpack.c.l.b16 %v226
      %v283 = vunpack.c.l.b16 %v227
      %v284 = vpack.c.b16 %v277, %v276
      %v285 = vpack.c.b16 %v279, %v278
      %v286 = vpack.c.b16 %v281, %v280
      %v287 = vpack.c.b16 %v283, %v282
      %vm292 = vcmask 523264
      %v294 = vsel %vm292, %v260, 0
      %v297 = vsel %vm292, %v261, 0
      %v300 = vsel %vm292, %v262, 0
      %v303 = vsel %vm292, %v263, 0
      %v306 = vsel %vm292, %v264, 0
      %v309 = vsel %vm292, %v265, 0
      %v312 = vsel %vm292, %v266, 0
      %v315 = vsel %vm292, %v267, 0
      %317 = vmatpush.bf16.msra.mxu0 0
      %318 = vmatpush.bf16.msra.mxu0 0
      %319 = vmatpush.bf16.msra.mxu0 0
      %320 = vmatpush.bf16.msra.mxu0 0
      %321 = vmatpush.bf16.msra.mxu0 %v287
      %322 = vmatpush.bf16.msra.mxu0 %v286
      %323 = vmatpush.bf16.msra.mxu0 %v285
      %324 = vmatpush.bf16.msra.mxu0 %v284
      %325 = vmatmul.bf16.gmra.mxu0 %v294
      %v326 = vpop.f32.mrf.mxu0
      %v327 = vadd.f32 0.0, %v326
      %v328 = vpop.f32.mrf.mxu0
      %v329 = vadd.f32 0.0, %v328
      %330 = vmatmul.bf16.gmra.mxu0 %v297
      %v331 = vpop.f32.mrf.mxu0
      %v332 = vadd.f32 0.0, %v331
      %v333 = vpop.f32.mrf.mxu0
      %v334 = vadd.f32 0.0, %v333
      %335 = vmatmul.bf16.gmra.mxu0 %v300
      %v336 = vpop.f32.mrf.mxu0
      %v337 = vadd.f32 0.0, %v336
      %v338 = vpop.f32.mrf.mxu0
      %v339 = vadd.f32 0.0, %v338
      %340 = vmatmul.bf16.gmra.mxu0 %v303
      %v341 = vpop.f32.mrf.mxu0
      %v342 = vadd.f32 0.0, %v341
      %v343 = vpop.f32.mrf.mxu0
      %v344 = vadd.f32 0.0, %v343
      %345 = vmatmul.bf16.gmra.mxu0 %v306
      %v346 = vpop.f32.mrf.mxu0
      %v347 = vadd.f32 0.0, %v346
      %v348 = vpop.f32.mrf.mxu0
      %v349 = vadd.f32 0.0, %v348
      %350 = vmatmul.bf16.gmra.mxu0 %v309
      %v351 = vpop.f32.mrf.mxu0
      %v352 = vadd.f32 0.0, %v351
      %v353 = vpop.f32.mrf.mxu0
      %v354 = vadd.f32 0.0, %v353
      %355 = vmatmul.bf16.gmra.mxu0 %v312
      %v356 = vpop.f32.mrf.mxu0
      %v357 = vadd.f32 0.0, %v356
      %v358 = vpop.f32.mrf.mxu0
      %v359 = vadd.f32 0.0, %v358
      %360 = vmatmul.bf16.gmra.mxu0 %v315
      %v361 = vpop.f32.mrf.mxu0
      %v362 = vadd.f32 0.0, %v361
      %v363 = vpop.f32.mrf.mxu0
      %v364 = vadd.f32 0.0, %v363
      %365 = vdwg.mxu0
      %v366 = vtanh.pop %v327
      %v367 = vtanh.pop %v329
      %v368 = vtanh.pop %v332
      %v369 = vtanh.pop %v334
      %v370 = vtanh.pop %v337
      %v371 = vtanh.pop %v339
      %v372 = vtanh.pop %v342
      %v373 = vtanh.pop %v344
      %v374 = vtanh.pop %v347
      %v375 = vtanh.pop %v349
      %v376 = vtanh.pop %v352
      %v377 = vtanh.pop %v354
      %v378 = vtanh.pop %v357
      %v379 = vtanh.pop %v359
      %v380 = vtanh.pop %v362
      %v381 = vtanh.pop %v364
      %382 = vst [vmem:[%s201] sm:$0xff] %v366
      %383 = vst [vmem:[%s201 + $0x8] sm:$0xff] %v367
      %384 = vst [vmem:[%s201 + $0x10] sm:$0xff] %v368
      %385 = vst [vmem:[%s201 + $0x18] sm:$0xff] %v369
      %386 = vst [vmem:[%s201 + $0x20] sm:$0xff] %v370
      %387 = vst [vmem:[%s201 + $0x28] sm:$0xff] %v371
      %388 = vst [vmem:[%s201 + $0x30] sm:$0xff] %v372
      %389 = vst [vmem:[%s201 + $0x38] sm:$0xff] %v373
      %390 = vst [vmem:[%s201 + $0x40] sm:$0xff] %v374
      %391 = vst [vmem:[%s201 + $0x48] sm:$0xff] %v375
      %392 = vst [vmem:[%s201 + $0x50] sm:$0xff] %v376
      %393 = vst [vmem:[%s201 + $0x58] sm:$0xff] %v377
      %394 = vst [vmem:[%s201 + $0x60] sm:$0xff] %v378
      %395 = vst [vmem:[%s201 + $0x68] sm:$0xff] %v379
      %396 = vst [vmem:[%s201 + $0x70] sm:$0xff] %v380
      %397 = vst [vmem:[%s201 + $0x78] sm:$0xff] %v381
      %s398 = smul.u32 16, %s18
      %p399 = scmp.lt.s32.totalorder %s17, 3
      %s400 = scalar_select %p399, %s17, 3
      %p401 = scmp.lt.s32.totalorder %s398, 15
      %s402 = scalar_select %p401, %s398, 15
      %s403 = smul.addr %s400, 16
      %s404 = sadd.s32 %s402, %s403
      %s405 = smul.addr %s404, 8
      %s406 = scalar_lea.vmem %s2, %s405
      // Predicated region
      $region29: #{_lambda_.9} parent=27 // pred_check
        %p407 = pneg %p99
      $region30: #{_lambda_.9} parent=27 // pred_check_branch
        %409 = sbr.rel (%p407) target = $region32
      $region31: #{_lambda_.9} parent=27 // pred_region
        %s410 = smul.u32 16, %s18
      $region32: #{_lambda_.9} parent=27 // pred_fallthru
        _
    $region28: #{_lambda_.9} parent=5 // pred_fallthru
      _
    %p411 = scmp.le.s32.totalorder 2, %s8
    // Predicated region
    $region33: #{_lambda_.9} parent=5 // pred_check
      %p412 = pneg %p411
    $region34: #{_lambda_.9} parent=5 // pred_check_branch
      %414 = sbr.rel (%p412) target = $region36
    $region35: #{_lambda_.9} parent=5 // pred_region
      %s415 = ssub.s32 %s8, 2
      // Predicated region
      $region37: #{_lambda_.9} parent=35 // pred_check
        %p416 = pneg %p105
      $region38: #{_lambda_.9} parent=35 // pred_check_branch
        %418 = sbr.rel (%p416) target = $region40
      $region39: #{_lambda_.9} parent=35 // pred_region
        %s419 = smul.u32 16, %s20
        %p420 = scmp.lt.s32.totalorder %s19, 3
        %s421 = scalar_select %p420, %s19, 3
        %p422 = scmp.lt.s32.totalorder %s419, 15
        %s423 = scalar_select %p422, %s419, 15
        %s424 = smul.addr %s421, 16
        %s425 = sadd.s32 %s423, %s424
        %s426 = smul.addr %s425, 8
        %s427 = scalar_lea.vmem %s2, %s426
      $region40: #{_lambda_.9} parent=35 // pred_fallthru
        _
    $region36: #{_lambda_.9} parent=5 // pred_fallthru
      _
  $region6: #{_lambda_.9} parent=0 // loop_footer
    %s12 = sadd.s32 1, %s8
  $region7: #{_lambda_.9} parent=0 // loop_footer_branch
    %7 = sbr.rel target = $region3
  $region8: #{_lambda_.9} parent=0 // loop_exit
    _

</llo_original>
